<compile_context>
chip_gen: v6e
topology: v6e:2x2x1
jax: 0.10.0
libtpu: 0.0.40
codegen_flags: <defaults>
</compile_context>

<pallas_src>
import functools

import numpy as np
import jax
import jax.numpy as jnp
from jax.experimental import pallas as pl
from jax.experimental.pallas import tpu as pltpu


def _round_up(x, m):
    return (x + m - 1) // m * m


def _lane_conv_weights(w, *, k, C, dx_off, valid_lo, valid_hi, Lp):
    """Fold an OIHW conv weight into per-(dy, lane-shift) weight vectors.

    For a lane-dense input slab `src` (rows, Lp) with lane = column*C + channel,
    the conv output at lane l is
        sum_{dy, j} roll(src[dy:dy+H], shift=-(shift_min + j), lanes)[l] * wv[dy, j, l]
    Output columns outside [valid_lo, valid_hi) (the zero-padding ring) and
    lanes >= the real data width get zero weights.
    """
    n_shift = (k + 1) * C - 1
    shift_min = -(dx_off * C + C - 1)
    wn = np.asarray(w, dtype=np.float32)
    wv = np.zeros((k, n_shift, Lp), np.float32)
    for dy in range(k):
        for dx in range(k):
            for ci in range(C):
                for co in range(C):
                    j = (dx - dx_off) * C + (ci - co) - shift_min
                    wv[dy, j, valid_lo * C + co:valid_hi * C:C] += wn[co, ci, dy, dx]
    return jnp.asarray(wv), shift_min


def _lane_bias(b, *, C, valid_lo, valid_hi, Lp):
    bn = np.asarray(b, dtype=np.float32)
    bv = np.zeros((1, Lp), np.float32)
    for co in range(C):
        bv[0, valid_lo * C + co:valid_hi * C:C] = bn[co]
    return jnp.asarray(bv)


def conv_block_kernel(a_ref, xres_ref, wv1_ref, bv1_ref, wv2_ref, bv2_ref,
                      out_ref, *, k, pad, H, Lp, n_shift, smin1, smin2):
    # a_ref   : (1, H+2p, Lp)   input, spatially pre-padded by `pad`, lane-dense
    # xres_ref: (1, H,    Lp)   raw x in the output layout (residual)
    # wv*_ref : (k, n_shift, Lp) folded per-(dy, lane-shift) weight vectors, f32
    # bv*_ref : (1, Lp)          lane-dense bias vectors (zero in padding), f32
    # out_ref : (1, H, Lp)       lane-dense output slab
    a = jnp.clip(a_ref[0], 0.0, 6.0)      # ReLU6; relu6(0)=0 keeps padding zero
    # TODO(synk): nn.Dropout is applied in the PyTorch forward (train mode);
    # implemented here as identity (inference / eval semantics).

    def lane_conv(src, wv_ref, smin):
        # src: (H + 2*pad, Lp).  Conv as k * n_shift lane-rolled FMAs (VPU/XLU).
        acc = jnp.zeros((H, Lp), jnp.float32)
        for dy in range(k):
            rows = src[dy:dy + H, :]
            for j in range(n_shift):
                s = smin + j
                shifted = rows if s == 0 else pltpu.roll(
                    rows, shift=(-s) % Lp, axis=1)
                acc = acc + shifted.astype(jnp.float32) * wv_ref[dy, j:j + 1, :]
        return acc

    # conv1, produced directly in conv2's zero-padded input layout: padding
    # ring columns are zero via the folded weights/bias, ring rows via concat.
    mid = jnp.clip(lane_conv(a, wv1_ref, smin1) + bv1_ref[...], 0.0, 6.0)
    zrows = jnp.zeros((pad, Lp), jnp.float32)
    a2 = jnp.concatenate([zrows, mid, zrows], axis=0)         # (H+2p, Lp), f32

    # conv2 + bias + residual, all in the lane-dense output layout.
    y2 = lane_conv(a2, wv2_ref, smin2) + bv2_ref[...]
    out_ref[0] = (y2 + xres_ref[0].astype(jnp.float32)).astype(out_ref.dtype)


def conv_block(x_nchw, w1, b1, w2, b2, pad):
    """x_nchw: (N,C,H,W); w*: PyTorch OIHW (C,C,k,k); b*: (C,). Returns NCHW."""
    N, C, H, W = x_nchw.shape
    k = 2 * pad + 1
    assert pad >= 1, "pad >= 1 (k >= 3) assumed"
    assert w1.shape == (C, C, k, k) and w2.shape == (C, C, k, k), (
        "ConvBlock residual add requires in_channels == out_channels")
    Wp = W + 2 * pad
    Lp = _round_up(Wp * C, 128)
    n_shift = (k + 1) * C - 1

    x_nhwc = jnp.transpose(x_nchw, (0, 2, 3, 1))
    # conv1 input: spatial pad by `pad`, channels packed into lanes, lane-pad to Lp.
    a_in = jnp.pad(x_nhwc, ((0, 0), (pad, pad), (pad, pad), (0, 0)))
    a_in = a_in.reshape(N, H + 2 * pad, Wp * C)
    a_in = jnp.pad(a_in, ((0, 0), (0, 0), (0, Lp - Wp * C)))
    # Residual, already in the lane-dense output layout.
    x_res = jnp.pad(x_nhwc.reshape(N, H, W * C), ((0, 0), (0, 0), (0, Lp - W * C)))

    wv1, smin1 = _lane_conv_weights(w1, k=k, C=C, dx_off=pad,
                                    valid_lo=pad, valid_hi=pad + W, Lp=Lp)
    wv2, smin2 = _lane_conv_weights(w2, k=k, C=C, dx_off=0,
                                    valid_lo=0, valid_hi=W, Lp=Lp)
    bv1 = _lane_bias(b1, C=C, valid_lo=pad, valid_hi=pad + W, Lp=Lp)
    bv2 = _lane_bias(b2, C=C, valid_lo=0, valid_hi=W, Lp=Lp)

    kernel = functools.partial(conv_block_kernel, k=k, pad=pad, H=H, Lp=Lp,
                               n_shift=n_shift, smin1=smin1, smin2=smin2)

    itemsize = x_nchw.dtype.itemsize
    # Per-step working set: double-buffered activation blocks + resident weights.
    block_bytes = (2 * ((H + 2 * pad) * Lp + 2 * H * Lp) * itemsize
                   + 2 * (2 * k * n_shift * Lp + 2 * Lp) * 4)
    vmem_limit = int(min(48 * 1024 * 1024, max(16 * 1024 * 1024, 8 * block_bytes)))
    flops = int(2 * N * 2 * k * n_shift * H * Lp)            # two convs, FMA = 2
    bytes_accessed = int((a_in.size + x_res.size + N * H * Lp) * itemsize
                         + (wv1.size + wv2.size + bv1.size + bv2.size) * 4)

    out_ld = pl.pallas_call(
        kernel,
        out_shape=jax.ShapeDtypeStruct((N, H, Lp), x_nchw.dtype),
        grid_spec=pltpu.PrefetchScalarGridSpec(
            num_scalar_prefetch=0,
            grid=(N,),
            in_specs=[
                pl.BlockSpec((1, H + 2 * pad, Lp), lambda n: (n, 0, 0)),
                pl.BlockSpec((1, H, Lp), lambda n: (n, 0, 0)),
                pl.BlockSpec((k, n_shift, Lp), lambda n: (0, 0, 0)),
                pl.BlockSpec((1, Lp), lambda n: (0, 0)),
                pl.BlockSpec((k, n_shift, Lp), lambda n: (0, 0, 0)),
                pl.BlockSpec((1, Lp), lambda n: (0, 0)),
            ],
            out_specs=pl.BlockSpec((1, H, Lp), lambda n: (n, 0, 0)),
        ),
        compiler_params=pltpu.CompilerParams(
            dimension_semantics=("parallel",),
            vmem_limit_bytes=vmem_limit),
        cost_estimate=pl.CostEstimate(
            flops=flops, transcendentals=0, bytes_accessed=bytes_accessed),
    )(a_in, x_res, wv1, bv1, wv2, bv2)

    out = out_ld[:, :, :W * C].reshape(N, H, W, C)
    return jnp.transpose(out, (0, 3, 1, 2))


def conv_block_reference(x, w1, b1, w2, b2, pad):
    """Pure-JAX reference of the PyTorch forward (dropout as identity)."""
    dn = ("NCHW", "OIHW", "NCHW")
    a = jnp.clip(x, 0.0, 6.0)
    y1 = jax.lax.conv_general_dilated(
        a, w1, (1, 1), [(pad, pad), (pad, pad)], dimension_numbers=dn)
    y1 = y1 + b1.reshape(1, -1, 1, 1)
    a2 = jnp.clip(y1, 0.0, 6.0)
    y2 = jax.lax.conv_general_dilated(
        a2, w2, (1, 1), [(pad, pad), (pad, pad)], dimension_numbers=dn)
    y2 = y2 + b2.reshape(1, -1, 1, 1)
    return y2 + x


if __name__ == "__main__":
    N, C, H, W = 2, 4, 16, 16
    pad = 1
    k = 2 * pad + 1

    key = jax.random.PRNGKey(0)
    kx, kw1, kb1, kw2, kb2 = jax.random.split(key, 5)
    x = jax.random.normal(kx, (N, C, H, W), jnp.float32)
    w1 = jax.random.normal(kw1, (C, C, k, k), jnp.float32) * 0.1
    b1 = jax.random.normal(kb1, (C,), jnp.float32) * 0.1
    w2 = jax.random.normal(kw2, (C, C, k, k), jnp.float32) * 0.1
    b2 = jax.random.normal(kb2, (C,), jnp.float32) * 0.1

    out = jax.block_until_ready(conv_block(x, w1, b1, w2, b2, pad))
    ref = jax.block_until_ready(conv_block_reference(x, w1, b1, w2, b2, pad))

    assert out.shape == (N, C, H, W), out.shape
    assert jnp.allclose(out, ref, atol=1e-4, rtol=1e-4), \
        float(jnp.max(jnp.abs(out - ref)))
    print("KERNEL_OK")
</pallas_src>

<mosaic_0001>
module attributes {stable_mosaic.version = 11 : i64} {
  func.func @conv_block_kernel(%arg0: i32, %arg1: memref<1x18x128xf32, #tpu.memory_space<vmem>>, %arg2: memref<1x16x128xf32, #tpu.memory_space<vmem>>, %arg3: memref<3x15x128xf32, #tpu.memory_space<vmem>>, %arg4: memref<1x128xf32, #tpu.memory_space<vmem>>, %arg5: memref<3x15x128xf32, #tpu.memory_space<vmem>>, %arg6: memref<1x128xf32, #tpu.memory_space<vmem>>, %arg7: memref<1x16x128xf32, #tpu.memory_space<vmem>>) attributes {dimension_semantics = [#tpu.dimension_semantics<parallel>], iteration_bounds = array<i64: 2>, scalar_prefetch = 0 : i64, scratch_operands = 0 : i64, tpu.core_type = #tpu.core_type<tc>, window_params = [{transform_indices = @transform_0, window_bounds = array<i64: 1, 18, 128>}, {transform_indices = @transform_1, window_bounds = array<i64: 1, 16, 128>}, {pipeline_mode = #tpu.pipeline_mode<synchronous>, transform_indices = @transform_2, window_bounds = array<i64: 3, 15, 128>}, {pipeline_mode = #tpu.pipeline_mode<synchronous>, transform_indices = @transform_3, window_bounds = array<i64: 1, 128>}, {pipeline_mode = #tpu.pipeline_mode<synchronous>, transform_indices = @transform_4, window_bounds = array<i64: 3, 15, 128>}, {pipeline_mode = #tpu.pipeline_mode<synchronous>, transform_indices = @transform_5, window_bounds = array<i64: 1, 128>}, {transform_indices = @transform_6, window_bounds = array<i64: 1, 16, 128>}]} {
    %c0 = arith.constant 0 : index
    %c0_0 = arith.constant 0 : index
    %c0_1 = arith.constant 0 : index
    %0 = vector.load %arg1[%c0, %c0_0, %c0_1] : memref<1x18x128xf32, #tpu.memory_space<vmem>>, vector<1x18x128xf32>
    %1 = vector.shape_cast %0 : vector<1x18x128xf32> to vector<18x128xf32>
    %cst = arith.constant 0.000000e+00 : f32
    %cst_2 = arith.constant 6.000000e+00 : f32
    %2 = vector.broadcast %cst : f32 to vector<18x128xf32>
    %3 = arith.maximumf %2, %1 : vector<18x128xf32>
    %4 = vector.broadcast %cst_2 : f32 to vector<18x128xf32>
    %5 = arith.minimumf %4, %3 : vector<18x128xf32>
    %cst_3 = arith.constant 0.000000e+00 : f32
    %6 = vector.broadcast %cst_3 : f32 to vector<16x128xf32>
    %7 = vector.extract_strided_slice %5 {offsets = [0, 0], sizes = [16, 128], strides = [1, 1]} : vector<18x128xf32> to vector<16x128xf32>
    %c7_i32 = arith.constant 7 : i32
    %8 = tpu.dynamic_rotate %7 by %c7_i32 dim 1 : vector<16x128xf32>, i32 -> vector<16x128xf32>
    %c0_4 = arith.constant 0 : index
    %c0_5 = arith.constant 0 : index
    %c0_6 = arith.constant 0 : index
    %9 = vector.load %arg3[%c0_4, %c0_5, %c0_6] : memref<3x15x128xf32, #tpu.memory_space<vmem>>, vector<1x1x128xf32>
    %10 = vector.shape_cast %9 : vector<1x1x128xf32> to vector<1x128xf32>
    %11 = vector.broadcast %10 : vector<1x128xf32> to vector<16x128xf32>
    %12 = arith.mulf %8, %11 : vector<16x128xf32>
    %13 = arith.addf %6, %12 : vector<16x128xf32>
    %c6_i32 = arith.constant 6 : i32
    %14 = tpu.dynamic_rotate %7 by %c6_i32 dim 1 : vector<16x128xf32>, i32 -> vector<16x128xf32>
    %c0_7 = arith.constant 0 : index
    %c1 = arith.constant 1 : index
    %c0_8 = arith.constant 0 : index
    %15 = vector.load %arg3[%c0_7, %c1, %c0_8] : memref<3x15x128xf32, #tpu.memory_space<vmem>>, vector<1x1x128xf32>
    %16 = vector.shape_cast %15 : vector<1x1x128xf32> to vector<1x128xf32>
    %17 = vector.broadcast %16 : vector<1x128xf32> to vector<16x128xf32>
    %18 = arith.mulf %14, %17 : vector<16x128xf32>
    %19 = arith.addf %13, %18 : vector<16x128xf32>
    %c5_i32 = arith.constant 5 : i32
    %20 = tpu.dynamic_rotate %7 by %c5_i32 dim 1 : vector<16x128xf32>, i32 -> vector<16x128xf32>
    %c0_9 = arith.constant 0 : index
    %c2 = arith.constant 2 : index
    %c0_10 = arith.constant 0 : index
    %21 = vector.load %arg3[%c0_9, %c2, %c0_10] : memref<3x15x128xf32, #tpu.memory_space<vmem>>, vector<1x1x128xf32>
    %22 = vector.shape_cast %21 : vector<1x1x128xf32> to vector<1x128xf32>
    %23 = vector.broadcast %22 : vector<1x128xf32> to vector<16x128xf32>
    %24 = arith.mulf %20, %23 : vector<16x128xf32>
    %25 = arith.addf %19, %24 : vector<16x128xf32>
    %c4_i32 = arith.constant 4 : i32
    %26 = tpu.dynamic_rotate %7 by %c4_i32 dim 1 : vector<16x128xf32>, i32 -> vector<16x128xf32>
    %c0_11 = arith.constant 0 : index
    %c3 = arith.constant 3 : index
    %c0_12 = arith.constant 0 : index
    %27 = vector.load %arg3[%c0_11, %c3, %c0_12] : memref<3x15x128xf32, #tpu.memory_space<vmem>>, vector<1x1x128xf32>
    %28 = vector.shape_cast %27 : vector<1x1x128xf32> to vector<1x128xf32>
    %29 = vector.broadcast %28 : vector<1x128xf32> to vector<16x128xf32>
    %30 = arith.mulf %26, %29 : vector<16x128xf32>
    %31 = arith.addf %25, %30 : vector<16x128xf32>
    %c3_i32 = arith.constant 3 : i32
    %32 = tpu.dynamic_rotate %7 by %c3_i32 dim 1 : vector<16x128xf32>, i32 -> vector<16x128xf32>
    %c0_13 = arith.constant 0 : index
    %c4 = arith.constant 4 : index
    %c0_14 = arith.constant 0 : index
    %33 = vector.load %arg3[%c0_13, %c4, %c0_14] : memref<3x15x128xf32, #tpu.memory_space<vmem>>, vector<1x1x128xf32>
    %34 = vector.shape_cast %33 : vector<1x1x128xf32> to vector<1x128xf32>
    %35 = vector.broadcast %34 : vector<1x128xf32> to vector<16x128xf32>
    %36 = arith.mulf %32, %35 : vector<16x128xf32>
    %37 = arith.addf %31, %36 : vector<16x128xf32>
    %c2_i32 = arith.constant 2 : i32
    %38 = tpu.dynamic_rotate %7 by %c2_i32 dim 1 : vector<16x128xf32>, i32 -> vector<16x128xf32>
    %c0_15 = arith.constant 0 : index
    %c5 = arith.constant 5 : index
    %c0_16 = arith.constant 0 : index
    %39 = vector.load %arg3[%c0_15, %c5, %c0_16] : memref<3x15x128xf32, #tpu.memory_space<vmem>>, vector<1x1x128xf32>
    %40 = vector.shape_cast %39 : vector<1x1x128xf32> to vector<1x128xf32>
    %41 = vector.broadcast %40 : vector<1x128xf32> to vector<16x128xf32>
    %42 = arith.mulf %38, %41 : vector<16x128xf32>
    %43 = arith.addf %37, %42 : vector<16x128xf32>
    %c1_i32 = arith.constant 1 : i32
    %44 = tpu.dynamic_rotate %7 by %c1_i32 dim 1 : vector<16x128xf32>, i32 -> vector<16x128xf32>
    %c0_17 = arith.constant 0 : index
    %c6 = arith.constant 6 : index
    %c0_18 = arith.constant 0 : index
    %45 = vector.load %arg3[%c0_17, %c6, %c0_18] : memref<3x15x128xf32, #tpu.memory_space<vmem>>, vector<1x1x128xf32>
    %46 = vector.shape_cast %45 : vector<1x1x128xf32> to vector<1x128xf32>
    %47 = vector.broadcast %46 : vector<1x128xf32> to vector<16x128xf32>
    %48 = arith.mulf %44, %47 : vector<16x128xf32>
    %49 = arith.addf %43, %48 : vector<16x128xf32>
    %c0_19 = arith.constant 0 : index
    %c7 = arith.constant 7 : index
    %c0_20 = arith.constant 0 : index
    %50 = vector.load %arg3[%c0_19, %c7, %c0_20] : memref<3x15x128xf32, #tpu.memory_space<vmem>>, vector<1x1x128xf32>
    %51 = vector.shape_cast %50 : vector<1x1x128xf32> to vector<1x128xf32>
    %52 = vector.broadcast %51 : vector<1x128xf32> to vector<16x128xf32>
    %53 = arith.mulf %7, %52 : vector<16x128xf32>
    %54 = arith.addf %49, %53 : vector<16x128xf32>
    %c127_i32 = arith.constant 127 : i32
    %55 = tpu.dynamic_rotate %7 by %c127_i32 dim 1 : vector<16x128xf32>, i32 -> vector<16x128xf32>
    %c0_21 = arith.constant 0 : index
    %c8 = arith.constant 8 : index
    %c0_22 = arith.constant 0 : index
    %56 = vector.load %arg3[%c0_21, %c8, %c0_22] : memref<3x15x128xf32, #tpu.memory_space<vmem>>, vector<1x1x128xf32>
    %57 = vector.shape_cast %56 : vector<1x1x128xf32> to vector<1x128xf32>
    %58 = vector.broadcast %57 : vector<1x128xf32> to vector<16x128xf32>
    %59 = arith.mulf %55, %58 : vector<16x128xf32>
    %60 = arith.addf %54, %59 : vector<16x128xf32>
    %c126_i32 = arith.constant 126 : i32
    %61 = tpu.dynamic_rotate %7 by %c126_i32 dim 1 : vector<16x128xf32>, i32 -> vector<16x128xf32>
    %c0_23 = arith.constant 0 : index
    %c9 = arith.constant 9 : index
    %c0_24 = arith.constant 0 : index
    %62 = vector.load %arg3[%c0_23, %c9, %c0_24] : memref<3x15x128xf32, #tpu.memory_space<vmem>>, vector<1x1x128xf32>
    %63 = vector.shape_cast %62 : vector<1x1x128xf32> to vector<1x128xf32>
    %64 = vector.broadcast %63 : vector<1x128xf32> to vector<16x128xf32>
    %65 = arith.mulf %61, %64 : vector<16x128xf32>
    %66 = arith.addf %60, %65 : vector<16x128xf32>
    %c125_i32 = arith.constant 125 : i32
    %67 = tpu.dynamic_rotate %7 by %c125_i32 dim 1 : vector<16x128xf32>, i32 -> vector<16x128xf32>
    %c0_25 = arith.constant 0 : index
    %c10 = arith.constant 10 : index
    %c0_26 = arith.constant 0 : index
    %68 = vector.load %arg3[%c0_25, %c10, %c0_26] : memref<3x15x128xf32, #tpu.memory_space<vmem>>, vector<1x1x128xf32>
    %69 = vector.shape_cast %68 : vector<1x1x128xf32> to vector<1x128xf32>
    %70 = vector.broadcast %69 : vector<1x128xf32> to vector<16x128xf32>
    %71 = arith.mulf %67, %70 : vector<16x128xf32>
    %72 = arith.addf %66, %71 : vector<16x128xf32>
    %c124_i32 = arith.constant 124 : i32
    %73 = tpu.dynamic_rotate %7 by %c124_i32 dim 1 : vector<16x128xf32>, i32 -> vector<16x128xf32>
    %c0_27 = arith.constant 0 : index
    %c11 = arith.constant 11 : index
    %c0_28 = arith.constant 0 : index
    %74 = vector.load %arg3[%c0_27, %c11, %c0_28] : memref<3x15x128xf32, #tpu.memory_space<vmem>>, vector<1x1x128xf32>
    %75 = vector.shape_cast %74 : vector<1x1x128xf32> to vector<1x128xf32>
    %76 = vector.broadcast %75 : vector<1x128xf32> to vector<16x128xf32>
    %77 = arith.mulf %73, %76 : vector<16x128xf32>
    %78 = arith.addf %72, %77 : vector<16x128xf32>
    %c123_i32 = arith.constant 123 : i32
    %79 = tpu.dynamic_rotate %7 by %c123_i32 dim 1 : vector<16x128xf32>, i32 -> vector<16x128xf32>
    %c0_29 = arith.constant 0 : index
    %c12 = arith.constant 12 : index
    %c0_30 = arith.constant 0 : index
    %80 = vector.load %arg3[%c0_29, %c12, %c0_30] : memref<3x15x128xf32, #tpu.memory_space<vmem>>, vector<1x1x128xf32>
    %81 = vector.shape_cast %80 : vector<1x1x128xf32> to vector<1x128xf32>
    %82 = vector.broadcast %81 : vector<1x128xf32> to vector<16x128xf32>
    %83 = arith.mulf %79, %82 : vector<16x128xf32>
    %84 = arith.addf %78, %83 : vector<16x128xf32>
    %c122_i32 = arith.constant 122 : i32
    %85 = tpu.dynamic_rotate %7 by %c122_i32 dim 1 : vector<16x128xf32>, i32 -> vector<16x128xf32>
    %c0_31 = arith.constant 0 : index
    %c13 = arith.constant 13 : index
    %c0_32 = arith.constant 0 : index
    %86 = vector.load %arg3[%c0_31, %c13, %c0_32] : memref<3x15x128xf32, #tpu.memory_space<vmem>>, vector<1x1x128xf32>
    %87 = vector.shape_cast %86 : vector<1x1x128xf32> to vector<1x128xf32>
    %88 = vector.broadcast %87 : vector<1x128xf32> to vector<16x128xf32>
    %89 = arith.mulf %85, %88 : vector<16x128xf32>
    %90 = arith.addf %84, %89 : vector<16x128xf32>
    %c121_i32 = arith.constant 121 : i32
    %91 = tpu.dynamic_rotate %7 by %c121_i32 dim 1 : vector<16x128xf32>, i32 -> vector<16x128xf32>
    %c0_33 = arith.constant 0 : index
    %c14 = arith.constant 14 : index
    %c0_34 = arith.constant 0 : index
    %92 = vector.load %arg3[%c0_33, %c14, %c0_34] : memref<3x15x128xf32, #tpu.memory_space<vmem>>, vector<1x1x128xf32>
    %93 = vector.shape_cast %92 : vector<1x1x128xf32> to vector<1x128xf32>
    %94 = vector.broadcast %93 : vector<1x128xf32> to vector<16x128xf32>
    %95 = arith.mulf %91, %94 : vector<16x128xf32>
    %96 = arith.addf %90, %95 : vector<16x128xf32>
    %97 = vector.extract_strided_slice %5 {offsets = [1, 0], sizes = [16, 128], strides = [1, 1]} : vector<18x128xf32> to vector<16x128xf32>
    %c7_i32_35 = arith.constant 7 : i32
    %98 = tpu.dynamic_rotate %97 by %c7_i32_35 dim 1 : vector<16x128xf32>, i32 -> vector<16x128xf32>
    %c1_36 = arith.constant 1 : index
    %c0_37 = arith.constant 0 : index
    %c0_38 = arith.constant 0 : index
    %99 = vector.load %arg3[%c1_36, %c0_37, %c0_38] : memref<3x15x128xf32, #tpu.memory_space<vmem>>, vector<1x1x128xf32>
    %100 = vector.shape_cast %99 : vector<1x1x128xf32> to vector<1x128xf32>
    %101 = vector.broadcast %100 : vector<1x128xf32> to vector<16x128xf32>
    %102 = arith.mulf %98, %101 : vector<16x128xf32>
    %103 = arith.addf %96, %102 : vector<16x128xf32>
    %c6_i32_39 = arith.constant 6 : i32
    %104 = tpu.dynamic_rotate %97 by %c6_i32_39 dim 1 : vector<16x128xf32>, i32 -> vector<16x128xf32>
    %c1_40 = arith.constant 1 : index
    %c1_41 = arith.constant 1 : index
    %c0_42 = arith.constant 0 : index
    %105 = vector.load %arg3[%c1_40, %c1_41, %c0_42] : memref<3x15x128xf32, #tpu.memory_space<vmem>>, vector<1x1x128xf32>
    %106 = vector.shape_cast %105 : vector<1x1x128xf32> to vector<1x128xf32>
    %107 = vector.broadcast %106 : vector<1x128xf32> to vector<16x128xf32>
    %108 = arith.mulf %104, %107 : vector<16x128xf32>
    %109 = arith.addf %103, %108 : vector<16x128xf32>
    %c5_i32_43 = arith.constant 5 : i32
    %110 = tpu.dynamic_rotate %97 by %c5_i32_43 dim 1 : vector<16x128xf32>, i32 -> vector<16x128xf32>
    %c1_44 = arith.constant 1 : index
    %c2_45 = arith.constant 2 : index
    %c0_46 = arith.constant 0 : index
    %111 = vector.load %arg3[%c1_44, %c2_45, %c0_46] : memref<3x15x128xf32, #tpu.memory_space<vmem>>, vector<1x1x128xf32>
    %112 = vector.shape_cast %111 : vector<1x1x128xf32> to vector<1x128xf32>
    %113 = vector.broadcast %112 : vector<1x128xf32> to vector<16x128xf32>
    %114 = arith.mulf %110, %113 : vector<16x128xf32>
    %115 = arith.addf %109, %114 : vector<16x128xf32>
    %c4_i32_47 = arith.constant 4 : i32
    %116 = tpu.dynamic_rotate %97 by %c4_i32_47 dim 1 : vector<16x128xf32>, i32 -> vector<16x128xf32>
    %c1_48 = arith.constant 1 : index
    %c3_49 = arith.constant 3 : index
    %c0_50 = arith.constant 0 : index
    %117 = vector.load %arg3[%c1_48, %c3_49, %c0_50] : memref<3x15x128xf32, #tpu.memory_space<vmem>>, vector<1x1x128xf32>
    %118 = vector.shape_cast %117 : vector<1x1x128xf32> to vector<1x128xf32>
    %119 = vector.broadcast %118 : vector<1x128xf32> to vector<16x128xf32>
    %120 = arith.mulf %116, %119 : vector<16x128xf32>
    %121 = arith.addf %115, %120 : vector<16x128xf32>
    %c3_i32_51 = arith.constant 3 : i32
    %122 = tpu.dynamic_rotate %97 by %c3_i32_51 dim 1 : vector<16x128xf32>, i32 -> vector<16x128xf32>
    %c1_52 = arith.constant 1 : index
    %c4_53 = arith.constant 4 : index
    %c0_54 = arith.constant 0 : index
    %123 = vector.load %arg3[%c1_52, %c4_53, %c0_54] : memref<3x15x128xf32, #tpu.memory_space<vmem>>, vector<1x1x128xf32>
    %124 = vector.shape_cast %123 : vector<1x1x128xf32> to vector<1x128xf32>
    %125 = vector.broadcast %124 : vector<1x128xf32> to vector<16x128xf32>
    %126 = arith.mulf %122, %125 : vector<16x128xf32>
    %127 = arith.addf %121, %126 : vector<16x128xf32>
    %c2_i32_55 = arith.constant 2 : i32
    %128 = tpu.dynamic_rotate %97 by %c2_i32_55 dim 1 : vector<16x128xf32>, i32 -> vector<16x128xf32>
    %c1_56 = arith.constant 1 : index
    %c5_57 = arith.constant 5 : index
    %c0_58 = arith.constant 0 : index
    %129 = vector.load %arg3[%c1_56, %c5_57, %c0_58] : memref<3x15x128xf32, #tpu.memory_space<vmem>>, vector<1x1x128xf32>
    %130 = vector.shape_cast %129 : vector<1x1x128xf32> to vector<1x128xf32>
    %131 = vector.broadcast %130 : vector<1x128xf32> to vector<16x128xf32>
    %132 = arith.mulf %128, %131 : vector<16x128xf32>
    %133 = arith.addf %127, %132 : vector<16x128xf32>
    %c1_i32_59 = arith.constant 1 : i32
    %134 = tpu.dynamic_rotate %97 by %c1_i32_59 dim 1 : vector<16x128xf32>, i32 -> vector<16x128xf32>
    %c1_60 = arith.constant 1 : index
    %c6_61 = arith.constant 6 : index
    %c0_62 = arith.constant 0 : index
    %135 = vector.load %arg3[%c1_60, %c6_61, %c0_62] : memref<3x15x128xf32, #tpu.memory_space<vmem>>, vector<1x1x128xf32>
    %136 = vector.shape_cast %135 : vector<1x1x128xf32> to vector<1x128xf32>
    %137 = vector.broadcast %136 : vector<1x128xf32> to vector<16x128xf32>
    %138 = arith.mulf %134, %137 : vector<16x128xf32>
    %139 = arith.addf %133, %138 : vector<16x128xf32>
    %c1_63 = arith.constant 1 : index
    %c7_64 = arith.constant 7 : index
    %c0_65 = arith.constant 0 : index
    %140 = vector.load %arg3[%c1_63, %c7_64, %c0_65] : memref<3x15x128xf32, #tpu.memory_space<vmem>>, vector<1x1x128xf32>
    %141 = vector.shape_cast %140 : vector<1x1x128xf32> to vector<1x128xf32>
    %142 = vector.broadcast %141 : vector<1x128xf32> to vector<16x128xf32>
    %143 = arith.mulf %97, %142 : vector<16x128xf32>
    %144 = arith.addf %139, %143 : vector<16x128xf32>
    %c127_i32_66 = arith.constant 127 : i32
    %145 = tpu.dynamic_rotate %97 by %c127_i32_66 dim 1 : vector<16x128xf32>, i32 -> vector<16x128xf32>
    %c1_67 = arith.constant 1 : index
    %c8_68 = arith.constant 8 : index
    %c0_69 = arith.constant 0 : index
    %146 = vector.load %arg3[%c1_67, %c8_68, %c0_69] : memref<3x15x128xf32, #tpu.memory_space<vmem>>, vector<1x1x128xf32>
    %147 = vector.shape_cast %146 : vector<1x1x128xf32> to vector<1x128xf32>
    %148 = vector.broadcast %147 : vector<1x128xf32> to vector<16x128xf32>
    %149 = arith.mulf %145, %148 : vector<16x128xf32>
    %150 = arith.addf %144, %149 : vector<16x128xf32>
    %c126_i32_70 = arith.constant 126 : i32
    %151 = tpu.dynamic_rotate %97 by %c126_i32_70 dim 1 : vector<16x128xf32>, i32 -> vector<16x128xf32>
    %c1_71 = arith.constant 1 : index
    %c9_72 = arith.constant 9 : index
    %c0_73 = arith.constant 0 : index
    %152 = vector.load %arg3[%c1_71, %c9_72, %c0_73] : memref<3x15x128xf32, #tpu.memory_space<vmem>>, vector<1x1x128xf32>
    %153 = vector.shape_cast %152 : vector<1x1x128xf32> to vector<1x128xf32>
    %154 = vector.broadcast %153 : vector<1x128xf32> to vector<16x128xf32>
    %155 = arith.mulf %151, %154 : vector<16x128xf32>
    %156 = arith.addf %150, %155 : vector<16x128xf32>
    %c125_i32_74 = arith.constant 125 : i32
    %157 = tpu.dynamic_rotate %97 by %c125_i32_74 dim 1 : vector<16x128xf32>, i32 -> vector<16x128xf32>
    %c1_75 = arith.constant 1 : index
    %c10_76 = arith.constant 10 : index
    %c0_77 = arith.constant 0 : index
    %158 = vector.load %arg3[%c1_75, %c10_76, %c0_77] : memref<3x15x128xf32, #tpu.memory_space<vmem>>, vector<1x1x128xf32>
    %159 = vector.shape_cast %158 : vector<1x1x128xf32> to vector<1x128xf32>
    %160 = vector.broadcast %159 : vector<1x128xf32> to vector<16x128xf32>
    %161 = arith.mulf %157, %160 : vector<16x128xf32>
    %162 = arith.addf %156, %161 : vector<16x128xf32>
    %c124_i32_78 = arith.constant 124 : i32
    %163 = tpu.dynamic_rotate %97 by %c124_i32_78 dim 1 : vector<16x128xf32>, i32 -> vector<16x128xf32>
    %c1_79 = arith.constant 1 : index
    %c11_80 = arith.constant 11 : index
    %c0_81 = arith.constant 0 : index
    %164 = vector.load %arg3[%c1_79, %c11_80, %c0_81] : memref<3x15x128xf32, #tpu.memory_space<vmem>>, vector<1x1x128xf32>
    %165 = vector.shape_cast %164 : vector<1x1x128xf32> to vector<1x128xf32>
    %166 = vector.broadcast %165 : vector<1x128xf32> to vector<16x128xf32>
    %167 = arith.mulf %163, %166 : vector<16x128xf32>
    %168 = arith.addf %162, %167 : vector<16x128xf32>
    %c123_i32_82 = arith.constant 123 : i32
    %169 = tpu.dynamic_rotate %97 by %c123_i32_82 dim 1 : vector<16x128xf32>, i32 -> vector<16x128xf32>
    %c1_83 = arith.constant 1 : index
    %c12_84 = arith.constant 12 : index
    %c0_85 = arith.constant 0 : index
    %170 = vector.load %arg3[%c1_83, %c12_84, %c0_85] : memref<3x15x128xf32, #tpu.memory_space<vmem>>, vector<1x1x128xf32>
    %171 = vector.shape_cast %170 : vector<1x1x128xf32> to vector<1x128xf32>
    %172 = vector.broadcast %171 : vector<1x128xf32> to vector<16x128xf32>
    %173 = arith.mulf %169, %172 : vector<16x128xf32>
    %174 = arith.addf %168, %173 : vector<16x128xf32>
    %c122_i32_86 = arith.constant 122 : i32
    %175 = tpu.dynamic_rotate %97 by %c122_i32_86 dim 1 : vector<16x128xf32>, i32 -> vector<16x128xf32>
    %c1_87 = arith.constant 1 : index
    %c13_88 = arith.constant 13 : index
    %c0_89 = arith.constant 0 : index
    %176 = vector.load %arg3[%c1_87, %c13_88, %c0_89] : memref<3x15x128xf32, #tpu.memory_space<vmem>>, vector<1x1x128xf32>
    %177 = vector.shape_cast %176 : vector<1x1x128xf32> to vector<1x128xf32>
    %178 = vector.broadcast %177 : vector<1x128xf32> to vector<16x128xf32>
    %179 = arith.mulf %175, %178 : vector<16x128xf32>
    %180 = arith.addf %174, %179 : vector<16x128xf32>
    %c121_i32_90 = arith.constant 121 : i32
    %181 = tpu.dynamic_rotate %97 by %c121_i32_90 dim 1 : vector<16x128xf32>, i32 -> vector<16x128xf32>
    %c1_91 = arith.constant 1 : index
    %c14_92 = arith.constant 14 : index
    %c0_93 = arith.constant 0 : index
    %182 = vector.load %arg3[%c1_91, %c14_92, %c0_93] : memref<3x15x128xf32, #tpu.memory_space<vmem>>, vector<1x1x128xf32>
    %183 = vector.shape_cast %182 : vector<1x1x128xf32> to vector<1x128xf32>
    %184 = vector.broadcast %183 : vector<1x128xf32> to vector<16x128xf32>
    %185 = arith.mulf %181, %184 : vector<16x128xf32>
    %186 = arith.addf %180, %185 : vector<16x128xf32>
    %187 = vector.extract_strided_slice %5 {offsets = [2, 0], sizes = [16, 128], strides = [1, 1]} : vector<18x128xf32> to vector<16x128xf32>
    %c7_i32_94 = arith.constant 7 : i32
    %188 = tpu.dynamic_rotate %187 by %c7_i32_94 dim 1 : vector<16x128xf32>, i32 -> vector<16x128xf32>
    %c2_95 = arith.constant 2 : index
    %c0_96 = arith.constant 0 : index
    %c0_97 = arith.constant 0 : index
    %189 = vector.load %arg3[%c2_95, %c0_96, %c0_97] : memref<3x15x128xf32, #tpu.memory_space<vmem>>, vector<1x1x128xf32>
    %190 = vector.shape_cast %189 : vector<1x1x128xf32> to vector<1x128xf32>
    %191 = vector.broadcast %190 : vector<1x128xf32> to vector<16x128xf32>
    %192 = arith.mulf %188, %191 : vector<16x128xf32>
    %193 = arith.addf %186, %192 : vector<16x128xf32>
    %c6_i32_98 = arith.constant 6 : i32
    %194 = tpu.dynamic_rotate %187 by %c6_i32_98 dim 1 : vector<16x128xf32>, i32 -> vector<16x128xf32>
    %c2_99 = arith.constant 2 : index
    %c1_100 = arith.constant 1 : index
    %c0_101 = arith.constant 0 : index
    %195 = vector.load %arg3[%c2_99, %c1_100, %c0_101] : memref<3x15x128xf32, #tpu.memory_space<vmem>>, vector<1x1x128xf32>
    %196 = vector.shape_cast %195 : vector<1x1x128xf32> to vector<1x128xf32>
    %197 = vector.broadcast %196 : vector<1x128xf32> to vector<16x128xf32>
    %198 = arith.mulf %194, %197 : vector<16x128xf32>
    %199 = arith.addf %193, %198 : vector<16x128xf32>
    %c5_i32_102 = arith.constant 5 : i32
    %200 = tpu.dynamic_rotate %187 by %c5_i32_102 dim 1 : vector<16x128xf32>, i32 -> vector<16x128xf32>
    %c2_103 = arith.constant 2 : index
    %c2_104 = arith.constant 2 : index
    %c0_105 = arith.constant 0 : index
    %201 = vector.load %arg3[%c2_103, %c2_104, %c0_105] : memref<3x15x128xf32, #tpu.memory_space<vmem>>, vector<1x1x128xf32>
    %202 = vector.shape_cast %201 : vector<1x1x128xf32> to vector<1x128xf32>
    %203 = vector.broadcast %202 : vector<1x128xf32> to vector<16x128xf32>
    %204 = arith.mulf %200, %203 : vector<16x128xf32>
    %205 = arith.addf %199, %204 : vector<16x128xf32>
    %c4_i32_106 = arith.constant 4 : i32
    %206 = tpu.dynamic_rotate %187 by %c4_i32_106 dim 1 : vector<16x128xf32>, i32 -> vector<16x128xf32>
    %c2_107 = arith.constant 2 : index
    %c3_108 = arith.constant 3 : index
    %c0_109 = arith.constant 0 : index
    %207 = vector.load %arg3[%c2_107, %c3_108, %c0_109] : memref<3x15x128xf32, #tpu.memory_space<vmem>>, vector<1x1x128xf32>
    %208 = vector.shape_cast %207 : vector<1x1x128xf32> to vector<1x128xf32>
    %209 = vector.broadcast %208 : vector<1x128xf32> to vector<16x128xf32>
    %210 = arith.mulf %206, %209 : vector<16x128xf32>
    %211 = arith.addf %205, %210 : vector<16x128xf32>
    %c3_i32_110 = arith.constant 3 : i32
    %212 = tpu.dynamic_rotate %187 by %c3_i32_110 dim 1 : vector<16x128xf32>, i32 -> vector<16x128xf32>
    %c2_111 = arith.constant 2 : index
    %c4_112 = arith.constant 4 : index
    %c0_113 = arith.constant 0 : index
    %213 = vector.load %arg3[%c2_111, %c4_112, %c0_113] : memref<3x15x128xf32, #tpu.memory_space<vmem>>, vector<1x1x128xf32>
    %214 = vector.shape_cast %213 : vector<1x1x128xf32> to vector<1x128xf32>
    %215 = vector.broadcast %214 : vector<1x128xf32> to vector<16x128xf32>
    %216 = arith.mulf %212, %215 : vector<16x128xf32>
    %217 = arith.addf %211, %216 : vector<16x128xf32>
    %c2_i32_114 = arith.constant 2 : i32
    %218 = tpu.dynamic_rotate %187 by %c2_i32_114 dim 1 : vector<16x128xf32>, i32 -> vector<16x128xf32>
    %c2_115 = arith.constant 2 : index
    %c5_116 = arith.constant 5 : index
    %c0_117 = arith.constant 0 : index
    %219 = vector.load %arg3[%c2_115, %c5_116, %c0_117] : memref<3x15x128xf32, #tpu.memory_space<vmem>>, vector<1x1x128xf32>
    %220 = vector.shape_cast %219 : vector<1x1x128xf32> to vector<1x128xf32>
    %221 = vector.broadcast %220 : vector<1x128xf32> to vector<16x128xf32>
    %222 = arith.mulf %218, %221 : vector<16x128xf32>
    %223 = arith.addf %217, %222 : vector<16x128xf32>
    %c1_i32_118 = arith.constant 1 : i32
    %224 = tpu.dynamic_rotate %187 by %c1_i32_118 dim 1 : vector<16x128xf32>, i32 -> vector<16x128xf32>
    %c2_119 = arith.constant 2 : index
    %c6_120 = arith.constant 6 : index
    %c0_121 = arith.constant 0 : index
    %225 = vector.load %arg3[%c2_119, %c6_120, %c0_121] : memref<3x15x128xf32, #tpu.memory_space<vmem>>, vector<1x1x128xf32>
    %226 = vector.shape_cast %225 : vector<1x1x128xf32> to vector<1x128xf32>
    %227 = vector.broadcast %226 : vector<1x128xf32> to vector<16x128xf32>
    %228 = arith.mulf %224, %227 : vector<16x128xf32>
    %229 = arith.addf %223, %228 : vector<16x128xf32>
    %c2_122 = arith.constant 2 : index
    %c7_123 = arith.constant 7 : index
    %c0_124 = arith.constant 0 : index
    %230 = vector.load %arg3[%c2_122, %c7_123, %c0_124] : memref<3x15x128xf32, #tpu.memory_space<vmem>>, vector<1x1x128xf32>
    %231 = vector.shape_cast %230 : vector<1x1x128xf32> to vector<1x128xf32>
    %232 = vector.broadcast %231 : vector<1x128xf32> to vector<16x128xf32>
    %233 = arith.mulf %187, %232 : vector<16x128xf32>
    %234 = arith.addf %229, %233 : vector<16x128xf32>
    %c127_i32_125 = arith.constant 127 : i32
    %235 = tpu.dynamic_rotate %187 by %c127_i32_125 dim 1 : vector<16x128xf32>, i32 -> vector<16x128xf32>
    %c2_126 = arith.constant 2 : index
    %c8_127 = arith.constant 8 : index
    %c0_128 = arith.constant 0 : index
    %236 = vector.load %arg3[%c2_126, %c8_127, %c0_128] : memref<3x15x128xf32, #tpu.memory_space<vmem>>, vector<1x1x128xf32>
    %237 = vector.shape_cast %236 : vector<1x1x128xf32> to vector<1x128xf32>
    %238 = vector.broadcast %237 : vector<1x128xf32> to vector<16x128xf32>
    %239 = arith.mulf %235, %238 : vector<16x128xf32>
    %240 = arith.addf %234, %239 : vector<16x128xf32>
    %c126_i32_129 = arith.constant 126 : i32
    %241 = tpu.dynamic_rotate %187 by %c126_i32_129 dim 1 : vector<16x128xf32>, i32 -> vector<16x128xf32>
    %c2_130 = arith.constant 2 : index
    %c9_131 = arith.constant 9 : index
    %c0_132 = arith.constant 0 : index
    %242 = vector.load %arg3[%c2_130, %c9_131, %c0_132] : memref<3x15x128xf32, #tpu.memory_space<vmem>>, vector<1x1x128xf32>
    %243 = vector.shape_cast %242 : vector<1x1x128xf32> to vector<1x128xf32>
    %244 = vector.broadcast %243 : vector<1x128xf32> to vector<16x128xf32>
    %245 = arith.mulf %241, %244 : vector<16x128xf32>
    %246 = arith.addf %240, %245 : vector<16x128xf32>
    %c125_i32_133 = arith.constant 125 : i32
    %247 = tpu.dynamic_rotate %187 by %c125_i32_133 dim 1 : vector<16x128xf32>, i32 -> vector<16x128xf32>
    %c2_134 = arith.constant 2 : index
    %c10_135 = arith.constant 10 : index
    %c0_136 = arith.constant 0 : index
    %248 = vector.load %arg3[%c2_134, %c10_135, %c0_136] : memref<3x15x128xf32, #tpu.memory_space<vmem>>, vector<1x1x128xf32>
    %249 = vector.shape_cast %248 : vector<1x1x128xf32> to vector<1x128xf32>
    %250 = vector.broadcast %249 : vector<1x128xf32> to vector<16x128xf32>
    %251 = arith.mulf %247, %250 : vector<16x128xf32>
    %252 = arith.addf %246, %251 : vector<16x128xf32>
    %c124_i32_137 = arith.constant 124 : i32
    %253 = tpu.dynamic_rotate %187 by %c124_i32_137 dim 1 : vector<16x128xf32>, i32 -> vector<16x128xf32>
    %c2_138 = arith.constant 2 : index
    %c11_139 = arith.constant 11 : index
    %c0_140 = arith.constant 0 : index
    %254 = vector.load %arg3[%c2_138, %c11_139, %c0_140] : memref<3x15x128xf32, #tpu.memory_space<vmem>>, vector<1x1x128xf32>
    %255 = vector.shape_cast %254 : vector<1x1x128xf32> to vector<1x128xf32>
    %256 = vector.broadcast %255 : vector<1x128xf32> to vector<16x128xf32>
    %257 = arith.mulf %253, %256 : vector<16x128xf32>
    %258 = arith.addf %252, %257 : vector<16x128xf32>
    %c123_i32_141 = arith.constant 123 : i32
    %259 = tpu.dynamic_rotate %187 by %c123_i32_141 dim 1 : vector<16x128xf32>, i32 -> vector<16x128xf32>
    %c2_142 = arith.constant 2 : index
    %c12_143 = arith.constant 12 : index
    %c0_144 = arith.constant 0 : index
    %260 = vector.load %arg3[%c2_142, %c12_143, %c0_144] : memref<3x15x128xf32, #tpu.memory_space<vmem>>, vector<1x1x128xf32>
    %261 = vector.shape_cast %260 : vector<1x1x128xf32> to vector<1x128xf32>
    %262 = vector.broadcast %261 : vector<1x128xf32> to vector<16x128xf32>
    %263 = arith.mulf %259, %262 : vector<16x128xf32>
    %264 = arith.addf %258, %263 : vector<16x128xf32>
    %c122_i32_145 = arith.constant 122 : i32
    %265 = tpu.dynamic_rotate %187 by %c122_i32_145 dim 1 : vector<16x128xf32>, i32 -> vector<16x128xf32>
    %c2_146 = arith.constant 2 : index
    %c13_147 = arith.constant 13 : index
    %c0_148 = arith.constant 0 : index
    %266 = vector.load %arg3[%c2_146, %c13_147, %c0_148] : memref<3x15x128xf32, #tpu.memory_space<vmem>>, vector<1x1x128xf32>
    %267 = vector.shape_cast %266 : vector<1x1x128xf32> to vector<1x128xf32>
    %268 = vector.broadcast %267 : vector<1x128xf32> to vector<16x128xf32>
    %269 = arith.mulf %265, %268 : vector<16x128xf32>
    %270 = arith.addf %264, %269 : vector<16x128xf32>
    %c121_i32_149 = arith.constant 121 : i32
    %271 = tpu.dynamic_rotate %187 by %c121_i32_149 dim 1 : vector<16x128xf32>, i32 -> vector<16x128xf32>
    %c2_150 = arith.constant 2 : index
    %c14_151 = arith.constant 14 : index
    %c0_152 = arith.constant 0 : index
    %272 = vector.load %arg3[%c2_150, %c14_151, %c0_152] : memref<3x15x128xf32, #tpu.memory_space<vmem>>, vector<1x1x128xf32>
    %273 = vector.shape_cast %272 : vector<1x1x128xf32> to vector<1x128xf32>
    %274 = vector.broadcast %273 : vector<1x128xf32> to vector<16x128xf32>
    %275 = arith.mulf %271, %274 : vector<16x128xf32>
    %276 = arith.addf %270, %275 : vector<16x128xf32>
    %c0_153 = arith.constant 0 : index
    %c0_154 = arith.constant 0 : index
    %277 = vector.load %arg4[%c0_153, %c0_154] : memref<1x128xf32, #tpu.memory_space<vmem>>, vector<1x128xf32>
    %278 = vector.broadcast %277 : vector<1x128xf32> to vector<16x128xf32>
    %279 = arith.addf %276, %278 : vector<16x128xf32>
    %cst_155 = arith.constant 0.000000e+00 : f32
    %cst_156 = arith.constant 6.000000e+00 : f32
    %280 = vector.broadcast %cst_155 : f32 to vector<16x128xf32>
    %281 = arith.maximumf %280, %279 : vector<16x128xf32>
    %282 = vector.broadcast %cst_156 : f32 to vector<16x128xf32>
    %283 = arith.minimumf %282, %281 : vector<16x128xf32>
    %cst_157 = arith.constant 0.000000e+00 : f32
    %284 = vector.broadcast %cst_157 : f32 to vector<1x128xf32>
    %285 = tpu.concatenate %284, %283, %284 in 0 : vector<1x128xf32>, vector<16x128xf32>, vector<1x128xf32> -> vector<18x128xf32>
    %cst_158 = arith.constant 0.000000e+00 : f32
    %286 = vector.broadcast %cst_158 : f32 to vector<16x128xf32>
    %287 = vector.extract_strided_slice %285 {offsets = [0, 0], sizes = [16, 128], strides = [1, 1]} : vector<18x128xf32> to vector<16x128xf32>
    %c3_i32_159 = arith.constant 3 : i32
    %288 = tpu.dynamic_rotate %287 by %c3_i32_159 dim 1 : vector<16x128xf32>, i32 -> vector<16x128xf32>
    %c0_160 = arith.constant 0 : index
    %c0_161 = arith.constant 0 : index
    %c0_162 = arith.constant 0 : index
    %289 = vector.load %arg5[%c0_160, %c0_161, %c0_162] : memref<3x15x128xf32, #tpu.memory_space<vmem>>, vector<1x1x128xf32>
    %290 = vector.shape_cast %289 : vector<1x1x128xf32> to vector<1x128xf32>
    %291 = vector.broadcast %290 : vector<1x128xf32> to vector<16x128xf32>
    %292 = arith.mulf %288, %291 : vector<16x128xf32>
    %293 = arith.addf %286, %292 : vector<16x128xf32>
    %c2_i32_163 = arith.constant 2 : i32
    %294 = tpu.dynamic_rotate %287 by %c2_i32_163 dim 1 : vector<16x128xf32>, i32 -> vector<16x128xf32>
    %c0_164 = arith.constant 0 : index
    %c1_165 = arith.constant 1 : index
    %c0_166 = arith.constant 0 : index
    %295 = vector.load %arg5[%c0_164, %c1_165, %c0_166] : memref<3x15x128xf32, #tpu.memory_space<vmem>>, vector<1x1x128xf32>
    %296 = vector.shape_cast %295 : vector<1x1x128xf32> to vector<1x128xf32>
    %297 = vector.broadcast %296 : vector<1x128xf32> to vector<16x128xf32>
    %298 = arith.mulf %294, %297 : vector<16x128xf32>
    %299 = arith.addf %293, %298 : vector<16x128xf32>
    %c1_i32_167 = arith.constant 1 : i32
    %300 = tpu.dynamic_rotate %287 by %c1_i32_167 dim 1 : vector<16x128xf32>, i32 -> vector<16x128xf32>
    %c0_168 = arith.constant 0 : index
    %c2_169 = arith.constant 2 : index
    %c0_170 = arith.constant 0 : index
    %301 = vector.load %arg5[%c0_168, %c2_169, %c0_170] : memref<3x15x128xf32, #tpu.memory_space<vmem>>, vector<1x1x128xf32>
    %302 = vector.shape_cast %301 : vector<1x1x128xf32> to vector<1x128xf32>
    %303 = vector.broadcast %302 : vector<1x128xf32> to vector<16x128xf32>
    %304 = arith.mulf %300, %303 : vector<16x128xf32>
    %305 = arith.addf %299, %304 : vector<16x128xf32>
    %c0_171 = arith.constant 0 : index
    %c3_172 = arith.constant 3 : index
    %c0_173 = arith.constant 0 : index
    %306 = vector.load %arg5[%c0_171, %c3_172, %c0_173] : memref<3x15x128xf32, #tpu.memory_space<vmem>>, vector<1x1x128xf32>
    %307 = vector.shape_cast %306 : vector<1x1x128xf32> to vector<1x128xf32>
    %308 = vector.broadcast %307 : vector<1x128xf32> to vector<16x128xf32>
    %309 = arith.mulf %287, %308 : vector<16x128xf32>
    %310 = arith.addf %305, %309 : vector<16x128xf32>
    %c127_i32_174 = arith.constant 127 : i32
    %311 = tpu.dynamic_rotate %287 by %c127_i32_174 dim 1 : vector<16x128xf32>, i32 -> vector<16x128xf32>
    %c0_175 = arith.constant 0 : index
    %c4_176 = arith.constant 4 : index
    %c0_177 = arith.constant 0 : index
    %312 = vector.load %arg5[%c0_175, %c4_176, %c0_177] : memref<3x15x128xf32, #tpu.memory_space<vmem>>, vector<1x1x128xf32>
    %313 = vector.shape_cast %312 : vector<1x1x128xf32> to vector<1x128xf32>
    %314 = vector.broadcast %313 : vector<1x128xf32> to vector<16x128xf32>
    %315 = arith.mulf %311, %314 : vector<16x128xf32>
    %316 = arith.addf %310, %315 : vector<16x128xf32>
    %c126_i32_178 = arith.constant 126 : i32
    %317 = tpu.dynamic_rotate %287 by %c126_i32_178 dim 1 : vector<16x128xf32>, i32 -> vector<16x128xf32>
    %c0_179 = arith.constant 0 : index
    %c5_180 = arith.constant 5 : index
    %c0_181 = arith.constant 0 : index
    %318 = vector.load %arg5[%c0_179, %c5_180, %c0_181] : memref<3x15x128xf32, #tpu.memory_space<vmem>>, vector<1x1x128xf32>
    %319 = vector.shape_cast %318 : vector<1x1x128xf32> to vector<1x128xf32>
    %320 = vector.broadcast %319 : vector<1x128xf32> to vector<16x128xf32>
    %321 = arith.mulf %317, %320 : vector<16x128xf32>
    %322 = arith.addf %316, %321 : vector<16x128xf32>
    %c125_i32_182 = arith.constant 125 : i32
    %323 = tpu.dynamic_rotate %287 by %c125_i32_182 dim 1 : vector<16x128xf32>, i32 -> vector<16x128xf32>
    %c0_183 = arith.constant 0 : index
    %c6_184 = arith.constant 6 : index
    %c0_185 = arith.constant 0 : index
    %324 = vector.load %arg5[%c0_183, %c6_184, %c0_185] : memref<3x15x128xf32, #tpu.memory_space<vmem>>, vector<1x1x128xf32>
    %325 = vector.shape_cast %324 : vector<1x1x128xf32> to vector<1x128xf32>
    %326 = vector.broadcast %325 : vector<1x128xf32> to vector<16x128xf32>
    %327 = arith.mulf %323, %326 : vector<16x128xf32>
    %328 = arith.addf %322, %327 : vector<16x128xf32>
    %c124_i32_186 = arith.constant 124 : i32
    %329 = tpu.dynamic_rotate %287 by %c124_i32_186 dim 1 : vector<16x128xf32>, i32 -> vector<16x128xf32>
    %c0_187 = arith.constant 0 : index
    %c7_188 = arith.constant 7 : index
    %c0_189 = arith.constant 0 : index
    %330 = vector.load %arg5[%c0_187, %c7_188, %c0_189] : memref<3x15x128xf32, #tpu.memory_space<vmem>>, vector<1x1x128xf32>
    %331 = vector.shape_cast %330 : vector<1x1x128xf32> to vector<1x128xf32>
    %332 = vector.broadcast %331 : vector<1x128xf32> to vector<16x128xf32>
    %333 = arith.mulf %329, %332 : vector<16x128xf32>
    %334 = arith.addf %328, %333 : vector<16x128xf32>
    %c123_i32_190 = arith.constant 123 : i32
    %335 = tpu.dynamic_rotate %287 by %c123_i32_190 dim 1 : vector<16x128xf32>, i32 -> vector<16x128xf32>
    %c0_191 = arith.constant 0 : index
    %c8_192 = arith.constant 8 : index
    %c0_193 = arith.constant 0 : index
    %336 = vector.load %arg5[%c0_191, %c8_192, %c0_193] : memref<3x15x128xf32, #tpu.memory_space<vmem>>, vector<1x1x128xf32>
    %337 = vector.shape_cast %336 : vector<1x1x128xf32> to vector<1x128xf32>
    %338 = vector.broadcast %337 : vector<1x128xf32> to vector<16x128xf32>
    %339 = arith.mulf %335, %338 : vector<16x128xf32>
    %340 = arith.addf %334, %339 : vector<16x128xf32>
    %c122_i32_194 = arith.constant 122 : i32
    %341 = tpu.dynamic_rotate %287 by %c122_i32_194 dim 1 : vector<16x128xf32>, i32 -> vector<16x128xf32>
    %c0_195 = arith.constant 0 : index
    %c9_196 = arith.constant 9 : index
    %c0_197 = arith.constant 0 : index
    %342 = vector.load %arg5[%c0_195, %c9_196, %c0_197] : memref<3x15x128xf32, #tpu.memory_space<vmem>>, vector<1x1x128xf32>
    %343 = vector.shape_cast %342 : vector<1x1x128xf32> to vector<1x128xf32>
    %344 = vector.broadcast %343 : vector<1x128xf32> to vector<16x128xf32>
    %345 = arith.mulf %341, %344 : vector<16x128xf32>
    %346 = arith.addf %340, %345 : vector<16x128xf32>
    %c121_i32_198 = arith.constant 121 : i32
    %347 = tpu.dynamic_rotate %287 by %c121_i32_198 dim 1 : vector<16x128xf32>, i32 -> vector<16x128xf32>
    %c0_199 = arith.constant 0 : index
    %c10_200 = arith.constant 10 : index
    %c0_201 = arith.constant 0 : index
    %348 = vector.load %arg5[%c0_199, %c10_200, %c0_201] : memref<3x15x128xf32, #tpu.memory_space<vmem>>, vector<1x1x128xf32>
    %349 = vector.shape_cast %348 : vector<1x1x128xf32> to vector<1x128xf32>
    %350 = vector.broadcast %349 : vector<1x128xf32> to vector<16x128xf32>
    %351 = arith.mulf %347, %350 : vector<16x128xf32>
    %352 = arith.addf %346, %351 : vector<16x128xf32>
    %c120_i32 = arith.constant 120 : i32
    %353 = tpu.dynamic_rotate %287 by %c120_i32 dim 1 : vector<16x128xf32>, i32 -> vector<16x128xf32>
    %c0_202 = arith.constant 0 : index
    %c11_203 = arith.constant 11 : index
    %c0_204 = arith.constant 0 : index
    %354 = vector.load %arg5[%c0_202, %c11_203, %c0_204] : memref<3x15x128xf32, #tpu.memory_space<vmem>>, vector<1x1x128xf32>
    %355 = vector.shape_cast %354 : vector<1x1x128xf32> to vector<1x128xf32>
    %356 = vector.broadcast %355 : vector<1x128xf32> to vector<16x128xf32>
    %357 = arith.mulf %353, %356 : vector<16x128xf32>
    %358 = arith.addf %352, %357 : vector<16x128xf32>
    %c119_i32 = arith.constant 119 : i32
    %359 = tpu.dynamic_rotate %287 by %c119_i32 dim 1 : vector<16x128xf32>, i32 -> vector<16x128xf32>
    %c0_205 = arith.constant 0 : index
    %c12_206 = arith.constant 12 : index
    %c0_207 = arith.constant 0 : index
    %360 = vector.load %arg5[%c0_205, %c12_206, %c0_207] : memref<3x15x128xf32, #tpu.memory_space<vmem>>, vector<1x1x128xf32>
    %361 = vector.shape_cast %360 : vector<1x1x128xf32> to vector<1x128xf32>
    %362 = vector.broadcast %361 : vector<1x128xf32> to vector<16x128xf32>
    %363 = arith.mulf %359, %362 : vector<16x128xf32>
    %364 = arith.addf %358, %363 : vector<16x128xf32>
    %c118_i32 = arith.constant 118 : i32
    %365 = tpu.dynamic_rotate %287 by %c118_i32 dim 1 : vector<16x128xf32>, i32 -> vector<16x128xf32>
    %c0_208 = arith.constant 0 : index
    %c13_209 = arith.constant 13 : index
    %c0_210 = arith.constant 0 : index
    %366 = vector.load %arg5[%c0_208, %c13_209, %c0_210] : memref<3x15x128xf32, #tpu.memory_space<vmem>>, vector<1x1x128xf32>
    %367 = vector.shape_cast %366 : vector<1x1x128xf32> to vector<1x128xf32>
    %368 = vector.broadcast %367 : vector<1x128xf32> to vector<16x128xf32>
    %369 = arith.mulf %365, %368 : vector<16x128xf32>
    %370 = arith.addf %364, %369 : vector<16x128xf32>
    %c117_i32 = arith.constant 117 : i32
    %371 = tpu.dynamic_rotate %287 by %c117_i32 dim 1 : vector<16x128xf32>, i32 -> vector<16x128xf32>
    %c0_211 = arith.constant 0 : index
    %c14_212 = arith.constant 14 : index
    %c0_213 = arith.constant 0 : index
    %372 = vector.load %arg5[%c0_211, %c14_212, %c0_213] : memref<3x15x128xf32, #tpu.memory_space<vmem>>, vector<1x1x128xf32>
    %373 = vector.shape_cast %372 : vector<1x1x128xf32> to vector<1x128xf32>
    %374 = vector.broadcast %373 : vector<1x128xf32> to vector<16x128xf32>
    %375 = arith.mulf %371, %374 : vector<16x128xf32>
    %376 = arith.addf %370, %375 : vector<16x128xf32>
    %377 = vector.extract_strided_slice %285 {offsets = [1, 0], sizes = [16, 128], strides = [1, 1]} : vector<18x128xf32> to vector<16x128xf32>
    %c3_i32_214 = arith.constant 3 : i32
    %378 = tpu.dynamic_rotate %377 by %c3_i32_214 dim 1 : vector<16x128xf32>, i32 -> vector<16x128xf32>
    %c1_215 = arith.constant 1 : index
    %c0_216 = arith.constant 0 : index
    %c0_217 = arith.constant 0 : index
    %379 = vector.load %arg5[%c1_215, %c0_216, %c0_217] : memref<3x15x128xf32, #tpu.memory_space<vmem>>, vector<1x1x128xf32>
    %380 = vector.shape_cast %379 : vector<1x1x128xf32> to vector<1x128xf32>
    %381 = vector.broadcast %380 : vector<1x128xf32> to vector<16x128xf32>
    %382 = arith.mulf %378, %381 : vector<16x128xf32>
    %383 = arith.addf %376, %382 : vector<16x128xf32>
    %c2_i32_218 = arith.constant 2 : i32
    %384 = tpu.dynamic_rotate %377 by %c2_i32_218 dim 1 : vector<16x128xf32>, i32 -> vector<16x128xf32>
    %c1_219 = arith.constant 1 : index
    %c1_220 = arith.constant 1 : index
    %c0_221 = arith.constant 0 : index
    %385 = vector.load %arg5[%c1_219, %c1_220, %c0_221] : memref<3x15x128xf32, #tpu.memory_space<vmem>>, vector<1x1x128xf32>
    %386 = vector.shape_cast %385 : vector<1x1x128xf32> to vector<1x128xf32>
    %387 = vector.broadcast %386 : vector<1x128xf32> to vector<16x128xf32>
    %388 = arith.mulf %384, %387 : vector<16x128xf32>
    %389 = arith.addf %383, %388 : vector<16x128xf32>
    %c1_i32_222 = arith.constant 1 : i32
    %390 = tpu.dynamic_rotate %377 by %c1_i32_222 dim 1 : vector<16x128xf32>, i32 -> vector<16x128xf32>
    %c1_223 = arith.constant 1 : index
    %c2_224 = arith.constant 2 : index
    %c0_225 = arith.constant 0 : index
    %391 = vector.load %arg5[%c1_223, %c2_224, %c0_225] : memref<3x15x128xf32, #tpu.memory_space<vmem>>, vector<1x1x128xf32>
    %392 = vector.shape_cast %391 : vector<1x1x128xf32> to vector<1x128xf32>
    %393 = vector.broadcast %392 : vector<1x128xf32> to vector<16x128xf32>
    %394 = arith.mulf %390, %393 : vector<16x128xf32>
    %395 = arith.addf %389, %394 : vector<16x128xf32>
    %c1_226 = arith.constant 1 : index
    %c3_227 = arith.constant 3 : index
    %c0_228 = arith.constant 0 : index
    %396 = vector.load %arg5[%c1_226, %c3_227, %c0_228] : memref<3x15x128xf32, #tpu.memory_space<vmem>>, vector<1x1x128xf32>
    %397 = vector.shape_cast %396 : vector<1x1x128xf32> to vector<1x128xf32>
    %398 = vector.broadcast %397 : vector<1x128xf32> to vector<16x128xf32>
    %399 = arith.mulf %377, %398 : vector<16x128xf32>
    %400 = arith.addf %395, %399 : vector<16x128xf32>
    %c127_i32_229 = arith.constant 127 : i32
    %401 = tpu.dynamic_rotate %377 by %c127_i32_229 dim 1 : vector<16x128xf32>, i32 -> vector<16x128xf32>
    %c1_230 = arith.constant 1 : index
    %c4_231 = arith.constant 4 : index
    %c0_232 = arith.constant 0 : index
    %402 = vector.load %arg5[%c1_230, %c4_231, %c0_232] : memref<3x15x128xf32, #tpu.memory_space<vmem>>, vector<1x1x128xf32>
    %403 = vector.shape_cast %402 : vector<1x1x128xf32> to vector<1x128xf32>
    %404 = vector.broadcast %403 : vector<1x128xf32> to vector<16x128xf32>
    %405 = arith.mulf %401, %404 : vector<16x128xf32>
    %406 = arith.addf %400, %405 : vector<16x128xf32>
    %c126_i32_233 = arith.constant 126 : i32
    %407 = tpu.dynamic_rotate %377 by %c126_i32_233 dim 1 : vector<16x128xf32>, i32 -> vector<16x128xf32>
    %c1_234 = arith.constant 1 : index
    %c5_235 = arith.constant 5 : index
    %c0_236 = arith.constant 0 : index
    %408 = vector.load %arg5[%c1_234, %c5_235, %c0_236] : memref<3x15x128xf32, #tpu.memory_space<vmem>>, vector<1x1x128xf32>
    %409 = vector.shape_cast %408 : vector<1x1x128xf32> to vector<1x128xf32>
    %410 = vector.broadcast %409 : vector<1x128xf32> to vector<16x128xf32>
    %411 = arith.mulf %407, %410 : vector<16x128xf32>
    %412 = arith.addf %406, %411 : vector<16x128xf32>
    %c125_i32_237 = arith.constant 125 : i32
    %413 = tpu.dynamic_rotate %377 by %c125_i32_237 dim 1 : vector<16x128xf32>, i32 -> vector<16x128xf32>
    %c1_238 = arith.constant 1 : index
    %c6_239 = arith.constant 6 : index
    %c0_240 = arith.constant 0 : index
    %414 = vector.load %arg5[%c1_238, %c6_239, %c0_240] : memref<3x15x128xf32, #tpu.memory_space<vmem>>, vector<1x1x128xf32>
    %415 = vector.shape_cast %414 : vector<1x1x128xf32> to vector<1x128xf32>
    %416 = vector.broadcast %415 : vector<1x128xf32> to vector<16x128xf32>
    %417 = arith.mulf %413, %416 : vector<16x128xf32>
    %418 = arith.addf %412, %417 : vector<16x128xf32>
    %c124_i32_241 = arith.constant 124 : i32
    %419 = tpu.dynamic_rotate %377 by %c124_i32_241 dim 1 : vector<16x128xf32>, i32 -> vector<16x128xf32>
    %c1_242 = arith.constant 1 : index
    %c7_243 = arith.constant 7 : index
    %c0_244 = arith.constant 0 : index
    %420 = vector.load %arg5[%c1_242, %c7_243, %c0_244] : memref<3x15x128xf32, #tpu.memory_space<vmem>>, vector<1x1x128xf32>
    %421 = vector.shape_cast %420 : vector<1x1x128xf32> to vector<1x128xf32>
    %422 = vector.broadcast %421 : vector<1x128xf32> to vector<16x128xf32>
    %423 = arith.mulf %419, %422 : vector<16x128xf32>
    %424 = arith.addf %418, %423 : vector<16x128xf32>
    %c123_i32_245 = arith.constant 123 : i32
    %425 = tpu.dynamic_rotate %377 by %c123_i32_245 dim 1 : vector<16x128xf32>, i32 -> vector<16x128xf32>
    %c1_246 = arith.constant 1 : index
    %c8_247 = arith.constant 8 : index
    %c0_248 = arith.constant 0 : index
    %426 = vector.load %arg5[%c1_246, %c8_247, %c0_248] : memref<3x15x128xf32, #tpu.memory_space<vmem>>, vector<1x1x128xf32>
    %427 = vector.shape_cast %426 : vector<1x1x128xf32> to vector<1x128xf32>
    %428 = vector.broadcast %427 : vector<1x128xf32> to vector<16x128xf32>
    %429 = arith.mulf %425, %428 : vector<16x128xf32>
    %430 = arith.addf %424, %429 : vector<16x128xf32>
    %c122_i32_249 = arith.constant 122 : i32
    %431 = tpu.dynamic_rotate %377 by %c122_i32_249 dim 1 : vector<16x128xf32>, i32 -> vector<16x128xf32>
    %c1_250 = arith.constant 1 : index
    %c9_251 = arith.constant 9 : index
    %c0_252 = arith.constant 0 : index
    %432 = vector.load %arg5[%c1_250, %c9_251, %c0_252] : memref<3x15x128xf32, #tpu.memory_space<vmem>>, vector<1x1x128xf32>
    %433 = vector.shape_cast %432 : vector<1x1x128xf32> to vector<1x128xf32>
    %434 = vector.broadcast %433 : vector<1x128xf32> to vector<16x128xf32>
    %435 = arith.mulf %431, %434 : vector<16x128xf32>
    %436 = arith.addf %430, %435 : vector<16x128xf32>
    %c121_i32_253 = arith.constant 121 : i32
    %437 = tpu.dynamic_rotate %377 by %c121_i32_253 dim 1 : vector<16x128xf32>, i32 -> vector<16x128xf32>
    %c1_254 = arith.constant 1 : index
    %c10_255 = arith.constant 10 : index
    %c0_256 = arith.constant 0 : index
    %438 = vector.load %arg5[%c1_254, %c10_255, %c0_256] : memref<3x15x128xf32, #tpu.memory_space<vmem>>, vector<1x1x128xf32>
    %439 = vector.shape_cast %438 : vector<1x1x128xf32> to vector<1x128xf32>
    %440 = vector.broadcast %439 : vector<1x128xf32> to vector<16x128xf32>
    %441 = arith.mulf %437, %440 : vector<16x128xf32>
    %442 = arith.addf %436, %441 : vector<16x128xf32>
    %c120_i32_257 = arith.constant 120 : i32
    %443 = tpu.dynamic_rotate %377 by %c120_i32_257 dim 1 : vector<16x128xf32>, i32 -> vector<16x128xf32>
    %c1_258 = arith.constant 1 : index
    %c11_259 = arith.constant 11 : index
    %c0_260 = arith.constant 0 : index
    %444 = vector.load %arg5[%c1_258, %c11_259, %c0_260] : memref<3x15x128xf32, #tpu.memory_space<vmem>>, vector<1x1x128xf32>
    %445 = vector.shape_cast %444 : vector<1x1x128xf32> to vector<1x128xf32>
    %446 = vector.broadcast %445 : vector<1x128xf32> to vector<16x128xf32>
    %447 = arith.mulf %443, %446 : vector<16x128xf32>
    %448 = arith.addf %442, %447 : vector<16x128xf32>
    %c119_i32_261 = arith.constant 119 : i32
    %449 = tpu.dynamic_rotate %377 by %c119_i32_261 dim 1 : vector<16x128xf32>, i32 -> vector<16x128xf32>
    %c1_262 = arith.constant 1 : index
    %c12_263 = arith.constant 12 : index
    %c0_264 = arith.constant 0 : index
    %450 = vector.load %arg5[%c1_262, %c12_263, %c0_264] : memref<3x15x128xf32, #tpu.memory_space<vmem>>, vector<1x1x128xf32>
    %451 = vector.shape_cast %450 : vector<1x1x128xf32> to vector<1x128xf32>
    %452 = vector.broadcast %451 : vector<1x128xf32> to vector<16x128xf32>
    %453 = arith.mulf %449, %452 : vector<16x128xf32>
    %454 = arith.addf %448, %453 : vector<16x128xf32>
    %c118_i32_265 = arith.constant 118 : i32
    %455 = tpu.dynamic_rotate %377 by %c118_i32_265 dim 1 : vector<16x128xf32>, i32 -> vector<16x128xf32>
    %c1_266 = arith.constant 1 : index
    %c13_267 = arith.constant 13 : index
    %c0_268 = arith.constant 0 : index
    %456 = vector.load %arg5[%c1_266, %c13_267, %c0_268] : memref<3x15x128xf32, #tpu.memory_space<vmem>>, vector<1x1x128xf32>
    %457 = vector.shape_cast %456 : vector<1x1x128xf32> to vector<1x128xf32>
    %458 = vector.broadcast %457 : vector<1x128xf32> to vector<16x128xf32>
    %459 = arith.mulf %455, %458 : vector<16x128xf32>
    %460 = arith.addf %454, %459 : vector<16x128xf32>
    %c117_i32_269 = arith.constant 117 : i32
    %461 = tpu.dynamic_rotate %377 by %c117_i32_269 dim 1 : vector<16x128xf32>, i32 -> vector<16x128xf32>
    %c1_270 = arith.constant 1 : index
    %c14_271 = arith.constant 14 : index
    %c0_272 = arith.constant 0 : index
    %462 = vector.load %arg5[%c1_270, %c14_271, %c0_272] : memref<3x15x128xf32, #tpu.memory_space<vmem>>, vector<1x1x128xf32>
    %463 = vector.shape_cast %462 : vector<1x1x128xf32> to vector<1x128xf32>
    %464 = vector.broadcast %463 : vector<1x128xf32> to vector<16x128xf32>
    %465 = arith.mulf %461, %464 : vector<16x128xf32>
    %466 = arith.addf %460, %465 : vector<16x128xf32>
    %467 = vector.extract_strided_slice %285 {offsets = [2, 0], sizes = [16, 128], strides = [1, 1]} : vector<18x128xf32> to vector<16x128xf32>
    %c3_i32_273 = arith.constant 3 : i32
    %468 = tpu.dynamic_rotate %467 by %c3_i32_273 dim 1 : vector<16x128xf32>, i32 -> vector<16x128xf32>
    %c2_274 = arith.constant 2 : index
    %c0_275 = arith.constant 0 : index
    %c0_276 = arith.constant 0 : index
    %469 = vector.load %arg5[%c2_274, %c0_275, %c0_276] : memref<3x15x128xf32, #tpu.memory_space<vmem>>, vector<1x1x128xf32>
    %470 = vector.shape_cast %469 : vector<1x1x128xf32> to vector<1x128xf32>
    %471 = vector.broadcast %470 : vector<1x128xf32> to vector<16x128xf32>
    %472 = arith.mulf %468, %471 : vector<16x128xf32>
    %473 = arith.addf %466, %472 : vector<16x128xf32>
    %c2_i32_277 = arith.constant 2 : i32
    %474 = tpu.dynamic_rotate %467 by %c2_i32_277 dim 1 : vector<16x128xf32>, i32 -> vector<16x128xf32>
    %c2_278 = arith.constant 2 : index
    %c1_279 = arith.constant 1 : index
    %c0_280 = arith.constant 0 : index
    %475 = vector.load %arg5[%c2_278, %c1_279, %c0_280] : memref<3x15x128xf32, #tpu.memory_space<vmem>>, vector<1x1x128xf32>
    %476 = vector.shape_cast %475 : vector<1x1x128xf32> to vector<1x128xf32>
    %477 = vector.broadcast %476 : vector<1x128xf32> to vector<16x128xf32>
    %478 = arith.mulf %474, %477 : vector<16x128xf32>
    %479 = arith.addf %473, %478 : vector<16x128xf32>
    %c1_i32_281 = arith.constant 1 : i32
    %480 = tpu.dynamic_rotate %467 by %c1_i32_281 dim 1 : vector<16x128xf32>, i32 -> vector<16x128xf32>
    %c2_282 = arith.constant 2 : index
    %c2_283 = arith.constant 2 : index
    %c0_284 = arith.constant 0 : index
    %481 = vector.load %arg5[%c2_282, %c2_283, %c0_284] : memref<3x15x128xf32, #tpu.memory_space<vmem>>, vector<1x1x128xf32>
    %482 = vector.shape_cast %481 : vector<1x1x128xf32> to vector<1x128xf32>
    %483 = vector.broadcast %482 : vector<1x128xf32> to vector<16x128xf32>
    %484 = arith.mulf %480, %483 : vector<16x128xf32>
    %485 = arith.addf %479, %484 : vector<16x128xf32>
    %c2_285 = arith.constant 2 : index
    %c3_286 = arith.constant 3 : index
    %c0_287 = arith.constant 0 : index
    %486 = vector.load %arg5[%c2_285, %c3_286, %c0_287] : memref<3x15x128xf32, #tpu.memory_space<vmem>>, vector<1x1x128xf32>
    %487 = vector.shape_cast %486 : vector<1x1x128xf32> to vector<1x128xf32>
    %488 = vector.broadcast %487 : vector<1x128xf32> to vector<16x128xf32>
    %489 = arith.mulf %467, %488 : vector<16x128xf32>
    %490 = arith.addf %485, %489 : vector<16x128xf32>
    %c127_i32_288 = arith.constant 127 : i32
    %491 = tpu.dynamic_rotate %467 by %c127_i32_288 dim 1 : vector<16x128xf32>, i32 -> vector<16x128xf32>
    %c2_289 = arith.constant 2 : index
    %c4_290 = arith.constant 4 : index
    %c0_291 = arith.constant 0 : index
    %492 = vector.load %arg5[%c2_289, %c4_290, %c0_291] : memref<3x15x128xf32, #tpu.memory_space<vmem>>, vector<1x1x128xf32>
    %493 = vector.shape_cast %492 : vector<1x1x128xf32> to vector<1x128xf32>
    %494 = vector.broadcast %493 : vector<1x128xf32> to vector<16x128xf32>
    %495 = arith.mulf %491, %494 : vector<16x128xf32>
    %496 = arith.addf %490, %495 : vector<16x128xf32>
    %c126_i32_292 = arith.constant 126 : i32
    %497 = tpu.dynamic_rotate %467 by %c126_i32_292 dim 1 : vector<16x128xf32>, i32 -> vector<16x128xf32>
    %c2_293 = arith.constant 2 : index
    %c5_294 = arith.constant 5 : index
    %c0_295 = arith.constant 0 : index
    %498 = vector.load %arg5[%c2_293, %c5_294, %c0_295] : memref<3x15x128xf32, #tpu.memory_space<vmem>>, vector<1x1x128xf32>
    %499 = vector.shape_cast %498 : vector<1x1x128xf32> to vector<1x128xf32>
    %500 = vector.broadcast %499 : vector<1x128xf32> to vector<16x128xf32>
    %501 = arith.mulf %497, %500 : vector<16x128xf32>
    %502 = arith.addf %496, %501 : vector<16x128xf32>
    %c125_i32_296 = arith.constant 125 : i32
    %503 = tpu.dynamic_rotate %467 by %c125_i32_296 dim 1 : vector<16x128xf32>, i32 -> vector<16x128xf32>
    %c2_297 = arith.constant 2 : index
    %c6_298 = arith.constant 6 : index
    %c0_299 = arith.constant 0 : index
    %504 = vector.load %arg5[%c2_297, %c6_298, %c0_299] : memref<3x15x128xf32, #tpu.memory_space<vmem>>, vector<1x1x128xf32>
    %505 = vector.shape_cast %504 : vector<1x1x128xf32> to vector<1x128xf32>
    %506 = vector.broadcast %505 : vector<1x128xf32> to vector<16x128xf32>
    %507 = arith.mulf %503, %506 : vector<16x128xf32>
    %508 = arith.addf %502, %507 : vector<16x128xf32>
    %c124_i32_300 = arith.constant 124 : i32
    %509 = tpu.dynamic_rotate %467 by %c124_i32_300 dim 1 : vector<16x128xf32>, i32 -> vector<16x128xf32>
    %c2_301 = arith.constant 2 : index
    %c7_302 = arith.constant 7 : index
    %c0_303 = arith.constant 0 : index
    %510 = vector.load %arg5[%c2_301, %c7_302, %c0_303] : memref<3x15x128xf32, #tpu.memory_space<vmem>>, vector<1x1x128xf32>
    %511 = vector.shape_cast %510 : vector<1x1x128xf32> to vector<1x128xf32>
    %512 = vector.broadcast %511 : vector<1x128xf32> to vector<16x128xf32>
    %513 = arith.mulf %509, %512 : vector<16x128xf32>
    %514 = arith.addf %508, %513 : vector<16x128xf32>
    %c123_i32_304 = arith.constant 123 : i32
    %515 = tpu.dynamic_rotate %467 by %c123_i32_304 dim 1 : vector<16x128xf32>, i32 -> vector<16x128xf32>
    %c2_305 = arith.constant 2 : index
    %c8_306 = arith.constant 8 : index
    %c0_307 = arith.constant 0 : index
    %516 = vector.load %arg5[%c2_305, %c8_306, %c0_307] : memref<3x15x128xf32, #tpu.memory_space<vmem>>, vector<1x1x128xf32>
    %517 = vector.shape_cast %516 : vector<1x1x128xf32> to vector<1x128xf32>
    %518 = vector.broadcast %517 : vector<1x128xf32> to vector<16x128xf32>
    %519 = arith.mulf %515, %518 : vector<16x128xf32>
    %520 = arith.addf %514, %519 : vector<16x128xf32>
    %c122_i32_308 = arith.constant 122 : i32
    %521 = tpu.dynamic_rotate %467 by %c122_i32_308 dim 1 : vector<16x128xf32>, i32 -> vector<16x128xf32>
    %c2_309 = arith.constant 2 : index
    %c9_310 = arith.constant 9 : index
    %c0_311 = arith.constant 0 : index
    %522 = vector.load %arg5[%c2_309, %c9_310, %c0_311] : memref<3x15x128xf32, #tpu.memory_space<vmem>>, vector<1x1x128xf32>
    %523 = vector.shape_cast %522 : vector<1x1x128xf32> to vector<1x128xf32>
    %524 = vector.broadcast %523 : vector<1x128xf32> to vector<16x128xf32>
    %525 = arith.mulf %521, %524 : vector<16x128xf32>
    %526 = arith.addf %520, %525 : vector<16x128xf32>
    %c121_i32_312 = arith.constant 121 : i32
    %527 = tpu.dynamic_rotate %467 by %c121_i32_312 dim 1 : vector<16x128xf32>, i32 -> vector<16x128xf32>
    %c2_313 = arith.constant 2 : index
    %c10_314 = arith.constant 10 : index
    %c0_315 = arith.constant 0 : index
    %528 = vector.load %arg5[%c2_313, %c10_314, %c0_315] : memref<3x15x128xf32, #tpu.memory_space<vmem>>, vector<1x1x128xf32>
    %529 = vector.shape_cast %528 : vector<1x1x128xf32> to vector<1x128xf32>
    %530 = vector.broadcast %529 : vector<1x128xf32> to vector<16x128xf32>
    %531 = arith.mulf %527, %530 : vector<16x128xf32>
    %532 = arith.addf %526, %531 : vector<16x128xf32>
    %c120_i32_316 = arith.constant 120 : i32
    %533 = tpu.dynamic_rotate %467 by %c120_i32_316 dim 1 : vector<16x128xf32>, i32 -> vector<16x128xf32>
    %c2_317 = arith.constant 2 : index
    %c11_318 = arith.constant 11 : index
    %c0_319 = arith.constant 0 : index
    %534 = vector.load %arg5[%c2_317, %c11_318, %c0_319] : memref<3x15x128xf32, #tpu.memory_space<vmem>>, vector<1x1x128xf32>
    %535 = vector.shape_cast %534 : vector<1x1x128xf32> to vector<1x128xf32>
    %536 = vector.broadcast %535 : vector<1x128xf32> to vector<16x128xf32>
    %537 = arith.mulf %533, %536 : vector<16x128xf32>
    %538 = arith.addf %532, %537 : vector<16x128xf32>
    %c119_i32_320 = arith.constant 119 : i32
    %539 = tpu.dynamic_rotate %467 by %c119_i32_320 dim 1 : vector<16x128xf32>, i32 -> vector<16x128xf32>
    %c2_321 = arith.constant 2 : index
    %c12_322 = arith.constant 12 : index
    %c0_323 = arith.constant 0 : index
    %540 = vector.load %arg5[%c2_321, %c12_322, %c0_323] : memref<3x15x128xf32, #tpu.memory_space<vmem>>, vector<1x1x128xf32>
    %541 = vector.shape_cast %540 : vector<1x1x128xf32> to vector<1x128xf32>
    %542 = vector.broadcast %541 : vector<1x128xf32> to vector<16x128xf32>
    %543 = arith.mulf %539, %542 : vector<16x128xf32>
    %544 = arith.addf %538, %543 : vector<16x128xf32>
    %c118_i32_324 = arith.constant 118 : i32
    %545 = tpu.dynamic_rotate %467 by %c118_i32_324 dim 1 : vector<16x128xf32>, i32 -> vector<16x128xf32>
    %c2_325 = arith.constant 2 : index
    %c13_326 = arith.constant 13 : index
    %c0_327 = arith.constant 0 : index
    %546 = vector.load %arg5[%c2_325, %c13_326, %c0_327] : memref<3x15x128xf32, #tpu.memory_space<vmem>>, vector<1x1x128xf32>
    %547 = vector.shape_cast %546 : vector<1x1x128xf32> to vector<1x128xf32>
    %548 = vector.broadcast %547 : vector<1x128xf32> to vector<16x128xf32>
    %549 = arith.mulf %545, %548 : vector<16x128xf32>
    %550 = arith.addf %544, %549 : vector<16x128xf32>
    %c117_i32_328 = arith.constant 117 : i32
    %551 = tpu.dynamic_rotate %467 by %c117_i32_328 dim 1 : vector<16x128xf32>, i32 -> vector<16x128xf32>
    %c2_329 = arith.constant 2 : index
    %c14_330 = arith.constant 14 : index
    %c0_331 = arith.constant 0 : index
    %552 = vector.load %arg5[%c2_329, %c14_330, %c0_331] : memref<3x15x128xf32, #tpu.memory_space<vmem>>, vector<1x1x128xf32>
    %553 = vector.shape_cast %552 : vector<1x1x128xf32> to vector<1x128xf32>
    %554 = vector.broadcast %553 : vector<1x128xf32> to vector<16x128xf32>
    %555 = arith.mulf %551, %554 : vector<16x128xf32>
    %556 = arith.addf %550, %555 : vector<16x128xf32>
    %c0_332 = arith.constant 0 : index
    %c0_333 = arith.constant 0 : index
    %557 = vector.load %arg6[%c0_332, %c0_333] : memref<1x128xf32, #tpu.memory_space<vmem>>, vector<1x128xf32>
    %558 = vector.broadcast %557 : vector<1x128xf32> to vector<16x128xf32>
    %559 = arith.addf %556, %558 : vector<16x128xf32>
    %c0_334 = arith.constant 0 : index
    %c0_335 = arith.constant 0 : index
    %c0_336 = arith.constant 0 : index
    %560 = vector.load %arg2[%c0_334, %c0_335, %c0_336] : memref<1x16x128xf32, #tpu.memory_space<vmem>>, vector<1x16x128xf32>
    %561 = vector.shape_cast %560 : vector<1x16x128xf32> to vector<16x128xf32>
    %562 = arith.addf %559, %561 : vector<16x128xf32>
    %c0_337 = arith.constant 0 : index
    %c0_338 = arith.constant 0 : index
    %c0_339 = arith.constant 0 : index
    %563 = vector.load %arg7[%c0_337, %c0_338, %c0_339] : memref<1x16x128xf32, #tpu.memory_space<vmem>>, vector<1x16x128xf32>
    %564 = vector.shape_cast %563 : vector<1x16x128xf32> to vector<16x128xf32>
    %565 = vector.shape_cast %562 : vector<16x128xf32> to vector<1x16x128xf32>
    tpu.vector_store %arg7[%c0_337, %c0_338, %c0_339], %565 {strides = array<i32>} : memref<1x16x128xf32, #tpu.memory_space<vmem>>, vector<1x16x128xf32>,
    return
  }
  func.func @transform_0(%arg0: i32) -> (i32, i32, i32) {
    %c0_i32 = arith.constant 0 : i32
    %c0_i32_0 = arith.constant 0 : i32
    %c0_i32_1 = arith.constant 0 : i32
    return %arg0, %c0_i32, %c0_i32_0 : i32, i32, i32
  }
  func.func @transform_1(%arg0: i32) -> (i32, i32, i32) {
    %c0_i32 = arith.constant 0 : i32
    %c0_i32_0 = arith.constant 0 : i32
    %c0_i32_1 = arith.constant 0 : i32
    return %arg0, %c0_i32, %c0_i32_0 : i32, i32, i32
  }
  func.func @transform_2(%arg0: i32) -> (i32, i32, i32) {
    %c0_i32 = arith.constant 0 : i32
    %c0_i32_0 = arith.constant 0 : i32
    %c0_i32_1 = arith.constant 0 : i32
    %c0_i32_2 = arith.constant 0 : i32
    return %c0_i32, %c0_i32_0, %c0_i32_1 : i32, i32, i32
  }
  func.func @transform_3(%arg0: i32) -> (i32, i32) {
    %c0_i32 = arith.constant 0 : i32
    %c0_i32_0 = arith.constant 0 : i32
    %c0_i32_1 = arith.constant 0 : i32
    return %c0_i32, %c0_i32_0 : i32, i32
  }
  func.func @transform_4(%arg0: i32) -> (i32, i32, i32) {
    %c0_i32 = arith.constant 0 : i32
    %c0_i32_0 = arith.constant 0 : i32
    %c0_i32_1 = arith.constant 0 : i32
    %c0_i32_2 = arith.constant 0 : i32
    return %c0_i32, %c0_i32_0, %c0_i32_1 : i32, i32, i32
  }
  func.func @transform_5(%arg0: i32) -> (i32, i32) {
    %c0_i32 = arith.constant 0 : i32
    %c0_i32_0 = arith.constant 0 : i32
    %c0_i32_1 = arith.constant 0 : i32
    return %c0_i32, %c0_i32_0 : i32, i32
  }
  func.func @transform_6(%arg0: i32) -> (i32, i32, i32) {
    %c0_i32 = arith.constant 0 : i32
    %c0_i32_0 = arith.constant 0 : i32
    %c0_i32_1 = arith.constant 0 : i32
    return %arg0, %c0_i32, %c0_i32_0 : i32, i32, i32
  }
}

</mosaic_0001>

<llo_original>
// kernel: tpu_custom_call.1
$region0: #{tpu_custom_call.1}
  #allocation0 [shape = 'u32[]', space=smem, size = 0x4, offset = 0x4, fixed_abs, tag = 'smem constant byte address 0x4 - core index']
  #allocation1 [shape = 'u32[144,128]{1,0:T(1,128)}', space=vmem, size = 0x12000, scoped, tag = 'internal scratch']
  %s0 = inlined_call_operand.vmem [shape: f32[2,18,128], index: 0, kind: input, shape index: {}]
  %s1 = inlined_call_operand.vmem [shape: f32[2,16,128], index: 1, kind: input, shape index: {}]
  %s2 = inlined_call_operand.vmem [shape: f32[3,15,128], index: 2, kind: input, shape index: {}]
  %s3 = inlined_call_operand.vmem [shape: f32[1,128], index: 3, kind: input, shape index: {}]
  %s4 = inlined_call_operand.hbm [shape: f32[3,15,128], index: 4, kind: input, shape index: {}]
  %s5 = inlined_call_operand.vmem [shape: f32[1,128], index: 5, kind: input, shape index: {}]
  %s6 = inlined_call_operand.hbm [shape: f32[2,16,128], index: 6, kind: output, shape index: {}]
  %s7 = sld [smem:[#allocation0]]
  $region61: #{tpu_custom_call.1} parent=0
    _
  %s9 = ssub.s32 1, %s7
  %s10 = scalar_select 0, %s9, %s7
  $region1: #{tpu_custom_call.1} parent=0
    #allocation2 [shape = 'u8[24576]{0}', space=vmem, size = 0x6000, scoped, tag = 'input window, operand 4, single buffered']
    #allocation3 [shape = 's32[2]{0}', space=sflag, size = 0x8, scoped, tag = 'scoped memory for tpu_custom_call.1']
    #allocation4 [shape = 's32[2]{0}', space=sflag, size = 0x8, scoped, tag = 'scoped memory for tpu_custom_call.1']
    #allocation5 [shape = 'u8[16384]{0}', space=vmem, size = 0x4000, scoped, tag = 'output window, operand 0']
    %11 = vsyncpa [#allocation3], 0
    %12 = vsyncpa [#allocation4], 0
    %s13 = scalar_lea.sflag [#allocation4], 1
    %14 = vsyncpa %s13, 0
    loop: start=0, step=1, limit=4
    $region2: #{tpu_custom_call.1} parent=1 // loop_pre_header
      _
    $region3: #{tpu_custom_call.1} parent=1 // loop_header
      %s16 = sphi 0, %s20
      %p17 = scmp.ge.s32.totalorder %s16, 4
      %s26 = sphi 0, %s28
      %s29 = sphi 0, %s26
      %s30 = sphi 0, %s29
      %s46 = sphi 0, %s30
      %s52 = sphi 0, %s54
      %s55 = sphi 0, %s52
      %s56 = sphi 0, %s55
      %s72 = sphi 0, %s56
      %s76 = sphi 0, %s76
      %s78 = sphi 0, %s76
      %s79 = sphi 0, %s78
      %s93 = sphi 0, %s79
      %s97 = sphi 0, %s97
      %s99 = sphi 0, %s97
      %s100 = sphi 0, %s99
      %s114 = sphi 0, %s100
      %s118 = sphi 0, %s118
      %s120 = sphi 0, %s118
      %s121 = sphi 0, %s120
      %s135 = sphi 0, %s121
      %s139 = sphi 0, %s139
      %s141 = sphi 0, %s139
      %s142 = sphi 0, %s141
      %s156 = sphi 0, %s142
      %s162 = sphi 0, %s164
      %s165 = sphi 0, %s162
      %s166 = sphi 0, %s165
      %s182 = sphi 0, %s166
    $region4: #{tpu_custom_call.1} parent=1 // loop_header_branch
      %19 = sbr.rel (%p17) target = $region8
    $region5: #{tpu_custom_call.1} parent=1 // loop_body
      %s21 = ssub.s32 %s16, 1
      %s22 = ssub.s32 %s16, 2
      %s23 = sadd.s32 %s16, 1
      %s24 = ssub.s32 %s16, %s23
      %p25 = scmp.eq.s32.totalorder %s24, 0
      %s27 = sadd.s32 %s26, 1
      %s28 = scalar_select %p25, %s26, %s27
      %p31 = pneg %p25
      %p32 = scmp.eq.s32.totalorder %s16, 1
      %p33 = por %p31, %p32
      %p34 = scmp.ne.s32.totalorder %s26, %s29
      %p35 = scmp.eq.s32.totalorder %s16, 0
      %p36 = por %p34, %p35
      %p37 = scmp.ne.s32.totalorder %s26, %s29
      %p38 = scmp.eq.s32.totalorder %s21, 1
      %p39 = por %p37, %p38
      %p40 = scmp.ne.s32.totalorder %s29, %s30
      %p41 = scmp.eq.s32.totalorder %s21, 0
      %p42 = por %p40, %p41
      %p43 = scmp.ne.s32.totalorder %s29, %s30
      %p44 = scmp.eq.s32.totalorder %s22, 1
      %p45 = por %p43, %p44
      %p47 = scmp.ne.s32.totalorder %s30, %s46
      %p48 = scmp.eq.s32.totalorder %s22, 0
      %p49 = por %p47, %p48
      %s50 = ssub.s32 %s16, %s23
      %p51 = scmp.eq.s32.totalorder %s50, 0
      %s53 = sadd.s32 %s52, 1
      %s54 = scalar_select %p51, %s52, %s53
      %p57 = pneg %p51
      %p58 = scmp.eq.s32.totalorder %s16, 1
      %p59 = por %p57, %p58
      %p60 = scmp.ne.s32.totalorder %s52, %s55
      %p61 = scmp.eq.s32.totalorder %s16, 0
      %p62 = por %p60, %p61
      %p63 = scmp.ne.s32.totalorder %s52, %s55
      %p64 = scmp.eq.s32.totalorder %s21, 1
      %p65 = por %p63, %p64
      %p66 = scmp.ne.s32.totalorder %s55, %s56
      %p67 = scmp.eq.s32.totalorder %s21, 0
      %p68 = por %p66, %p67
      %p69 = scmp.ne.s32.totalorder %s55, %s56
      %p70 = scmp.eq.s32.totalorder %s22, 1
      %p71 = por %p69, %p70
      %p73 = scmp.ne.s32.totalorder %s56, %s72
      %p74 = scmp.eq.s32.totalorder %s22, 0
      %p75 = por %p73, %p74
      %s77 = sadd.s32 %s76, 1
      %p80 = scmp.eq.s32.totalorder %s16, 1
      %p81 = scmp.ne.s32.totalorder %s76, %s78
      %p82 = scmp.eq.s32.totalorder %s16, 0
      %p83 = por %p81, %p82
      %p84 = scmp.ne.s32.totalorder %s76, %s78
      %p85 = scmp.eq.s32.totalorder %s21, 1
      %p86 = por %p84, %p85
      %p87 = scmp.ne.s32.totalorder %s78, %s79
      %p88 = scmp.eq.s32.totalorder %s21, 0
      %p89 = por %p87, %p88
      %p90 = scmp.ne.s32.totalorder %s78, %s79
      %p91 = scmp.eq.s32.totalorder %s22, 1
      %p92 = por %p90, %p91
      %p94 = scmp.ne.s32.totalorder %s79, %s93
      %p95 = scmp.eq.s32.totalorder %s22, 0
      %p96 = por %p94, %p95
      %s98 = sadd.s32 %s97, 1
      %p101 = scmp.eq.s32.totalorder %s16, 1
      %p102 = scmp.ne.s32.totalorder %s97, %s99
      %p103 = scmp.eq.s32.totalorder %s16, 0
      %p104 = por %p102, %p103
      %p105 = scmp.ne.s32.totalorder %s97, %s99
      %p106 = scmp.eq.s32.totalorder %s21, 1
      %p107 = por %p105, %p106
      %p108 = scmp.ne.s32.totalorder %s99, %s100
      %p109 = scmp.eq.s32.totalorder %s21, 0
      %p110 = por %p108, %p109
      %p111 = scmp.ne.s32.totalorder %s99, %s100
      %p112 = scmp.eq.s32.totalorder %s22, 1
      %p113 = por %p111, %p112
      %p115 = scmp.ne.s32.totalorder %s100, %s114
      %p116 = scmp.eq.s32.totalorder %s22, 0
      %p117 = por %p115, %p116
      %s119 = sadd.s32 %s118, 1
      %p122 = scmp.eq.s32.totalorder %s16, 1
      %p123 = scmp.ne.s32.totalorder %s118, %s120
      %p124 = scmp.eq.s32.totalorder %s16, 0
      %p125 = por %p123, %p124
      %p126 = scmp.ne.s32.totalorder %s118, %s120
      %p127 = scmp.eq.s32.totalorder %s21, 1
      %p128 = por %p126, %p127
      %p129 = scmp.ne.s32.totalorder %s120, %s121
      %p130 = scmp.eq.s32.totalorder %s21, 0
      %p131 = por %p129, %p130
      %p132 = scmp.ne.s32.totalorder %s120, %s121
      %p133 = scmp.eq.s32.totalorder %s22, 1
      %p134 = por %p132, %p133
      %p136 = scmp.ne.s32.totalorder %s121, %s135
      %p137 = scmp.eq.s32.totalorder %s22, 0
      %p138 = por %p136, %p137
      %s140 = sadd.s32 %s139, 1
      %p143 = scmp.eq.s32.totalorder %s16, 1
      %p144 = scmp.ne.s32.totalorder %s139, %s141
      %p145 = scmp.eq.s32.totalorder %s16, 0
      %p146 = por %p144, %p145
      %p147 = scmp.ne.s32.totalorder %s139, %s141
      %p148 = scmp.eq.s32.totalorder %s21, 1
      %p149 = por %p147, %p148
      %p150 = scmp.ne.s32.totalorder %s141, %s142
      %p151 = scmp.eq.s32.totalorder %s21, 0
      %p152 = por %p150, %p151
      %p153 = scmp.ne.s32.totalorder %s141, %s142
      %p154 = scmp.eq.s32.totalorder %s22, 1
      %p155 = por %p153, %p154
      %p157 = scmp.ne.s32.totalorder %s142, %s156
      %p158 = scmp.eq.s32.totalorder %s22, 0
      %p159 = por %p157, %p158
      %s160 = ssub.s32 %s16, %s23
      %p161 = scmp.eq.s32.totalorder %s160, 0
      %s163 = sadd.s32 %s162, 1
      %s164 = scalar_select %p161, %s162, %s163
      %p167 = pneg %p161
      %p168 = scmp.eq.s32.totalorder %s16, 1
      %p169 = por %p167, %p168
      %p170 = scmp.ne.s32.totalorder %s162, %s165
      %p171 = scmp.eq.s32.totalorder %s16, 0
      %p172 = por %p170, %p171
      %p173 = scmp.ne.s32.totalorder %s162, %s165
      %p174 = scmp.eq.s32.totalorder %s21, 1
      %p175 = por %p173, %p174
      %p176 = scmp.ne.s32.totalorder %s165, %s166
      %p177 = scmp.eq.s32.totalorder %s21, 0
      %p178 = por %p176, %p177
      %p179 = scmp.ne.s32.totalorder %s165, %s166
      %p180 = scmp.eq.s32.totalorder %s22, 1
      %p181 = por %p179, %p180
      %p183 = scmp.ne.s32.totalorder %s166, %s182
      %p184 = scmp.eq.s32.totalorder %s22, 0
      %p185 = por %p183, %p184
      %p186 = scmp.le.s32.totalorder 1, %s16
      %p187 = scmp.lt.s32.totalorder %s16, 3
      %p188 = pnand %p186, %p187
      %p189 = pneg %p188
      // Predicated region
      $region9: #{tpu_custom_call.1} parent=5 // pred_check
        _
      $region10: #{tpu_custom_call.1} parent=5 // pred_check_branch
        %191 = sbr.rel (%p188) target = $region12
      $region11: #{tpu_custom_call.1} parent=5 // pred_region
        %s192 = ssub.s32 %s16, 1
        // Predicated region
        $region13: #{tpu_custom_call.1} parent=11 // pred_check
          %p193 = pneg %p89
        $region14: #{tpu_custom_call.1} parent=11 // pred_check_branch
          %195 = sbr.rel (%p193) target = $region16
        $region15: #{tpu_custom_call.1} parent=11 // pred_region
          _
        $region16: #{tpu_custom_call.1} parent=11 // pred_fallthru
          _
        // Predicated region
        $region17: #{tpu_custom_call.1} parent=11 // pred_check
          %p196 = pneg %p110
        $region18: #{tpu_custom_call.1} parent=11 // pred_check_branch
          %198 = sbr.rel (%p196) target = $region20
        $region19: #{tpu_custom_call.1} parent=11 // pred_region
          _
        $region20: #{tpu_custom_call.1} parent=11 // pred_fallthru
          _
        // Predicated region
        $region21: #{tpu_custom_call.1} parent=11 // pred_check
          %p199 = pneg %p131
        $region22: #{tpu_custom_call.1} parent=11 // pred_check_branch
          %201 = sbr.rel (%p199) target = $region24
        $region23: #{tpu_custom_call.1} parent=11 // pred_region
          %s203 = ssub.s32 768, 768
          %204 = vsyncadd [#allocation3], %s203
          %s205 = sshll.u32 [#allocation2], 4
          %s206 = int_to_ptr.vmem [resolvable:$true] %s205
          %211 = dma.hbm_to_vmem [thread:$0]  %s4, 768, %s206, [#allocation3], 128, 128, 8
        $region24: #{tpu_custom_call.1} parent=11 // pred_fallthru
          _
        // Predicated region
        $region25: #{tpu_custom_call.1} parent=11 // pred_check
          %p212 = pneg %p152
        $region26: #{tpu_custom_call.1} parent=11 // pred_check_branch
          %214 = sbr.rel (%p212) target = $region28
        $region27: #{tpu_custom_call.1} parent=11 // pred_region
          _
        $region28: #{tpu_custom_call.1} parent=11 // pred_fallthru
          _
      $region12: #{tpu_custom_call.1} parent=5 // pred_fallthru
        _
      %p215 = scmp.lt.s32.totalorder %s16, 2
      // Predicated region
      $region29: #{tpu_custom_call.1} parent=5 // pred_check
        %p216 = pneg %p215
      $region30: #{tpu_custom_call.1} parent=5 // pred_check_branch
        %218 = sbr.rel (%p216) target = $region32
      $region31: #{tpu_custom_call.1} parent=5 // pred_region
        // Predicated region
        $region33: #{tpu_custom_call.1} parent=31 // pred_check
          %p219 = pneg %p36
        $region34: #{tpu_custom_call.1} parent=31 // pred_check_branch
          %221 = sbr.rel (%p219) target = $region36
        $region35: #{tpu_custom_call.1} parent=31 // pred_region
          %p222 = scmp.lt.s32.totalorder %s16, 1
          %s223 = scalar_select %p222, %s16, 1
          %s224 = smul.addr %s223, 3
          %s225 = smul.addr %s224, 8
          %s226 = scalar_lea.vmem %s0, %s225
        $region36: #{tpu_custom_call.1} parent=31 // pred_fallthru
          _
        // Predicated region
        $region37: #{tpu_custom_call.1} parent=31 // pred_check
          %p227 = pneg %p62
        $region38: #{tpu_custom_call.1} parent=31 // pred_check_branch
          %229 = sbr.rel (%p227) target = $region40
        $region39: #{tpu_custom_call.1} parent=31 // pred_region
          %p230 = scmp.lt.s32.totalorder %s16, 1
          %s231 = scalar_select %p230, %s16, 1
          %s232 = smul.addr %s231, 2
          %s233 = smul.addr %s232, 8
          %s234 = scalar_lea.vmem %s1, %s233
        $region40: #{tpu_custom_call.1} parent=31 // pred_fallthru
          _
      $region32: #{tpu_custom_call.1} parent=5 // pred_fallthru
        _
      %p235 = scmp.le.s32.totalorder 1, %s16
      %p236 = scmp.lt.s32.totalorder %s16, 3
      %p237 = pnand %p235, %p236
      %p238 = pneg %p237
      // Predicated region
      $region41: #{tpu_custom_call.1} parent=5 // pred_check
        _
      $region42: #{tpu_custom_call.1} parent=5 // pred_check_branch
        %240 = sbr.rel (%p237) target = $region44
      $region43: #{tpu_custom_call.1} parent=5 // pred_region
        %s241 = ssub.s32 %s16, 1
        // Predicated region
        $region45: #{tpu_custom_call.1} parent=43 // pred_check
          %p242 = pneg %p131
        $region46: #{tpu_custom_call.1} parent=43 // pred_check_branch
          %244 = sbr.rel (%p242) target = $region48
        $region47: #{tpu_custom_call.1} parent=43 // pred_region
          %245 = dma.done [#allocation3], 768
        $region48: #{tpu_custom_call.1} parent=43 // pred_fallthru
          _
        %p246 = scmp.lt.s32.totalorder %s21, 1
        %s247 = scalar_select %p246, %s21, 1
        %s248 = smul.addr %s247, 3
        %s249 = smul.addr %s248, 8
        %s250 = scalar_lea.vmem %s0, %s249
        %p251 = pneg %p42
        %p252 = pneg %p39
        %p253 = scmp.lt.s32.totalorder %s21, 1
        %s254 = scalar_select %p253, %s21, 1
        %s255 = smul.addr %s254, 2
        %s256 = smul.addr %s255, 8
        %s257 = scalar_lea.vmem %s1, %s256
        %p258 = pneg %p68
        %p259 = pneg %p65
        %p260 = pneg %p89
        %p261 = pneg %p86
        %p262 = pneg %p110
        %p263 = pneg %p107
        %p264 = pneg %p131
        %p265 = pneg %p128
        %p266 = pneg %p152
        %p267 = pneg %p149
        %p268 = pneg %p178
        %p269 = pneg %p175
        %s270 = sand.u32 %s165, 1
        %s271 = scalar_lea.sflag [#allocation4], %s270
        %s272 = sand.u32 %s165, 1
        %s273 = smul.addr %s272, 16
        %s274 = scalar_lea.vmem [#allocation5], %s273
        %p275 = scmp.lt.s32.totalorder %s21, 1
        %s276 = scalar_select %p275, %s21, 1
        %s277 = smul.addr %s276, 3
        %s278 = smul.addr %s277, 8
        %s279 = scalar_lea.vmem %s0, %s278
        %p280 = scmp.lt.s32.totalorder %s21, 1
        %s281 = scalar_select %p280, %s21, 1
        %s282 = smul.addr %s281, 2
        %s283 = smul.addr %s282, 8
        %s284 = scalar_lea.vmem %s1, %s283
        %v285 = vld [vmem:[%s279] sm:$0xff]
        %v286 = vld [vmem:[%s279 + $0x8] sm:$0xff]
        %v287 = vld [vmem:[%s279 + $0x10] sm:$0x3]
        %v288 = vmax.f32 %v285, 0.0
        %v289 = vmax.f32 %v286, 0.0
        %v290 = vmax.f32 %v287, 0.0
        %v291 = vmin.f32 %v288, 6.0
        %v292 = vmin.f32 %v289, 6.0
        %v293 = vmin.f32 %v290, 6.0
        %294 = vrot.lane.b32.xlu0 %v291, 7
        %v295 = vpop.permute.xlu0 %294
        %296 = vrot.lane.b32.xlu0 %v292, 7
        %v297 = vpop.permute.xlu0 %296
        %v298 = vld [vmem:[%s2] sm:$0x1]
        %v299 = vlaneseq
        %v300 = vshrl.u32 %v299, 7
        %v301 = vsub.s32 0, %v300
        %v302 = vrot.slane %v298, %v301
        %v303 = vmul.f32 %v295, %v302
        %v304 = vmul.f32 %v297, %v302
        %v305 = vadd.f32 %v303, 0.0
        %v306 = vadd.f32 %v304, 0.0
        %307 = vrot.lane.b32.xlu0 %v291, 6
        %v308 = vpop.permute.xlu0 %307
        %309 = vrot.lane.b32.xlu0 %v292, 6
        %v310 = vpop.permute.xlu0 %309
        %v311 = vld [vmem:[%s2 + $0x1] sm:$0x1]
        %v312 = vlaneseq
        %v313 = vshrl.u32 %v312, 7
        %v314 = vsub.s32 0, %v313
        %v315 = vrot.slane %v311, %v314
        %v316 = vmul.f32 %v308, %v315
        %v317 = vmul.f32 %v310, %v315
        %v318 = vadd.f32 %v305, %v316
        %v319 = vadd.f32 %v306, %v317
        %320 = vrot.lane.b32.xlu0 %v291, 5
        %v321 = vpop.permute.xlu0 %320
        %322 = vrot.lane.b32.xlu0 %v292, 5
        %v323 = vpop.permute.xlu0 %322
        %v324 = vld [vmem:[%s2 + $0x2] sm:$0x1]
        %v325 = vlaneseq
        %v326 = vshrl.u32 %v325, 7
        %v327 = vsub.s32 0, %v326
        %v328 = vrot.slane %v324, %v327
        %v329 = vmul.f32 %v321, %v328
        %v330 = vmul.f32 %v323, %v328
        %v331 = vadd.f32 %v318, %v329
        %v332 = vadd.f32 %v319, %v330
        %333 = vrot.lane.b32.xlu0 %v291, 4
        %v334 = vpop.permute.xlu0 %333
        %335 = vrot.lane.b32.xlu0 %v292, 4
        %v336 = vpop.permute.xlu0 %335
        %v337 = vld [vmem:[%s2 + $0x3] sm:$0x1]
        %v338 = vlaneseq
        %v339 = vshrl.u32 %v338, 7
        %v340 = vsub.s32 0, %v339
        %v341 = vrot.slane %v337, %v340
        %v342 = vmul.f32 %v334, %v341
        %v343 = vmul.f32 %v336, %v341
        %v344 = vadd.f32 %v331, %v342
        %v345 = vadd.f32 %v332, %v343
        %346 = vrot.lane.b32.xlu0 %v291, 3
        %v347 = vpop.permute.xlu0 %346
        %348 = vrot.lane.b32.xlu0 %v292, 3
        %v349 = vpop.permute.xlu0 %348
        %v350 = vld [vmem:[%s2 + $0x4] sm:$0x1]
        %v351 = vlaneseq
        %v352 = vshrl.u32 %v351, 7
        %v353 = vsub.s32 0, %v352
        %v354 = vrot.slane %v350, %v353
        %v355 = vmul.f32 %v347, %v354
        %v356 = vmul.f32 %v349, %v354
        %v357 = vadd.f32 %v344, %v355
        %v358 = vadd.f32 %v345, %v356
        %359 = vrot.lane.b32.xlu0 %v291, 2
        %v360 = vpop.permute.xlu0 %359
        %361 = vrot.lane.b32.xlu0 %v292, 2
        %v362 = vpop.permute.xlu0 %361
        %v363 = vld [vmem:[%s2 + $0x5] sm:$0x1]
        %v364 = vlaneseq
        %v365 = vshrl.u32 %v364, 7
        %v366 = vsub.s32 0, %v365
        %v367 = vrot.slane %v363, %v366
        %v368 = vmul.f32 %v360, %v367
        %v369 = vmul.f32 %v362, %v367
        %v370 = vadd.f32 %v357, %v368
        %v371 = vadd.f32 %v358, %v369
        %372 = vrot.lane.b32.xlu0 %v291, 1
        %v373 = vpop.permute.xlu0 %372
        %374 = vrot.lane.b32.xlu0 %v292, 1
        %v375 = vpop.permute.xlu0 %374
        %v376 = vld [vmem:[%s2 + $0x6] sm:$0x1]
        %v377 = vlaneseq
        %v378 = vshrl.u32 %v377, 7
        %v379 = vsub.s32 0, %v378
        %v380 = vrot.slane %v376, %v379
        %v381 = vmul.f32 %v373, %v380
        %v382 = vmul.f32 %v375, %v380
        %v383 = vadd.f32 %v370, %v381
        %v384 = vadd.f32 %v371, %v382
        %v385 = vld [vmem:[%s2 + $0x7] sm:$0x1]
        %v386 = vlaneseq
        %v387 = vshrl.u32 %v386, 7
        %v388 = vsub.s32 0, %v387
        %v389 = vrot.slane %v385, %v388
        %v390 = vmul.f32 %v291, %v389
        %v391 = vmul.f32 %v292, %v389
        %v392 = vadd.f32 %v383, %v390
        %v393 = vadd.f32 %v384, %v391
        %394 = vrot.lane.b32.xlu0 %v291, 127
        %v395 = vpop.permute.xlu0 %394
        %396 = vrot.lane.b32.xlu0 %v292, 127
        %v397 = vpop.permute.xlu0 %396
        %v398 = vld [vmem:[%s2 + $0x8] sm:$0x1]
        %v399 = vlaneseq
        %v400 = vshrl.u32 %v399, 7
        %v401 = vsub.s32 0, %v400
        %v402 = vrot.slane %v398, %v401
        %v403 = vmul.f32 %v395, %v402
        %v404 = vmul.f32 %v397, %v402
        %v405 = vadd.f32 %v392, %v403
        %v406 = vadd.f32 %v393, %v404
        %407 = vrot.lane.b32.xlu0 %v291, 126
        %v408 = vpop.permute.xlu0 %407
        %409 = vrot.lane.b32.xlu0 %v292, 126
        %v410 = vpop.permute.xlu0 %409
        %v411 = vld [vmem:[%s2 + $0x9] sm:$0x1]
        %v412 = vlaneseq
        %v413 = vshrl.u32 %v412, 7
        %v414 = vsub.s32 0, %v413
        %v415 = vrot.slane %v411, %v414
        %v416 = vmul.f32 %v408, %v415
        %v417 = vmul.f32 %v410, %v415
        %v418 = vadd.f32 %v405, %v416
        %v419 = vadd.f32 %v406, %v417
        %420 = vrot.lane.b32.xlu0 %v291, 125
        %v421 = vpop.permute.xlu0 %420
        %422 = vrot.lane.b32.xlu0 %v292, 125
        %v423 = vpop.permute.xlu0 %422
        %v424 = vld [vmem:[%s2 + $0xa] sm:$0x1]
        %v425 = vlaneseq
        %v426 = vshrl.u32 %v425, 7
        %v427 = vsub.s32 0, %v426
        %v428 = vrot.slane %v424, %v427
        %v429 = vmul.f32 %v421, %v428
        %v430 = vmul.f32 %v423, %v428
        %v431 = vadd.f32 %v418, %v429
        %v432 = vadd.f32 %v419, %v430
        %433 = vrot.lane.b32.xlu0 %v291, 124
        %v434 = vpop.permute.xlu0 %433
        %435 = vrot.lane.b32.xlu0 %v292, 124
        %v436 = vpop.permute.xlu0 %435
        %v437 = vld [vmem:[%s2 + $0xb] sm:$0x1]
        %v438 = vlaneseq
        %v439 = vshrl.u32 %v438, 7
        %v440 = vsub.s32 0, %v439
        %v441 = vrot.slane %v437, %v440
        %v442 = vmul.f32 %v434, %v441
        %v443 = vmul.f32 %v436, %v441
        %v444 = vadd.f32 %v431, %v442
        %v445 = vadd.f32 %v432, %v443
        %446 = vrot.lane.b32.xlu0 %v291, 123
        %v447 = vpop.permute.xlu0 %446
        %448 = vrot.lane.b32.xlu0 %v292, 123
        %v449 = vpop.permute.xlu0 %448
        %v450 = vld [vmem:[%s2 + $0xc] sm:$0x1]
        %v451 = vlaneseq
        %v452 = vshrl.u32 %v451, 7
        %v453 = vsub.s32 0, %v452
        %v454 = vrot.slane %v450, %v453
        %v455 = vmul.f32 %v447, %v454
        %v456 = vmul.f32 %v449, %v454
        %v457 = vadd.f32 %v444, %v455
        %v458 = vadd.f32 %v445, %v456
        %459 = vrot.lane.b32.xlu0 %v291, 122
        %v460 = vpop.permute.xlu0 %459
        %461 = vrot.lane.b32.xlu0 %v292, 122
        %v462 = vpop.permute.xlu0 %461
        %v463 = vld [vmem:[%s2 + $0xd] sm:$0x1]
        %v464 = vlaneseq
        %v465 = vshrl.u32 %v464, 7
        %v466 = vsub.s32 0, %v465
        %v467 = vrot.slane %v463, %v466
        %v468 = vmul.f32 %v460, %v467
        %v469 = vmul.f32 %v462, %v467
        %v470 = vadd.f32 %v457, %v468
        %v471 = vadd.f32 %v458, %v469
        %472 = vrot.lane.b32.xlu0 %v291, 121
        %v473 = vpop.permute.xlu0 %472
        %474 = vrot.lane.b32.xlu0 %v292, 121
        %v475 = vpop.permute.xlu0 %474
        %v476 = vld [vmem:[%s2 + $0xe] sm:$0x1]
        %v477 = vlaneseq
        %v478 = vshrl.u32 %v477, 7
        %v479 = vsub.s32 0, %v478
        %v480 = vrot.slane %v476, %v479
        %v481 = vmul.f32 %v473, %v480
        %v482 = vmul.f32 %v475, %v480
        %v483 = vadd.f32 %v470, %v481
        %v484 = vadd.f32 %v471, %v482
        %vm488 = vcmask 1046528
        %v489 = vrot.slane %v291, 1
        %v490 = vrot.slane %v292, 1
        %v491 = vsel %vm488, %v489, %v490
        %v492 = vrot.slane %v293, 1
        %v493 = vsel %vm488, %v490, %v492
        %496 = vrot.lane.b32.xlu0 %v491, 7
        %v497 = vpop.permute.xlu0 %496
        %498 = vrot.lane.b32.xlu0 %v493, 7
        %v499 = vpop.permute.xlu0 %498
        %s500 = scalar_lea.vmem %s2, 16
        %v501 = vld [vmem:[%s500] sm:$0x1]
        %v502 = vlaneseq
        %v503 = vshrl.u32 %v502, 7
        %v504 = vsub.s32 0, %v503
        %v505 = vrot.slane %v501, %v504
        %v506 = vmul.f32 %v497, %v505
        %v507 = vmul.f32 %v499, %v505
        %v508 = vadd.f32 %v483, %v506
        %v509 = vadd.f32 %v484, %v507
        %510 = vrot.lane.b32.xlu0 %v491, 6
        %v511 = vpop.permute.xlu0 %510
        %512 = vrot.lane.b32.xlu0 %v493, 6
        %v513 = vpop.permute.xlu0 %512
        %v514 = vld [vmem:[%s500 + $0x1] sm:$0x1]
        %v515 = vlaneseq
        %v516 = vshrl.u32 %v515, 7
        %v517 = vsub.s32 0, %v516
        %v518 = vrot.slane %v514, %v517
        %v519 = vmul.f32 %v511, %v518
        %v520 = vmul.f32 %v513, %v518
        %v521 = vadd.f32 %v508, %v519
        %v522 = vadd.f32 %v509, %v520
        %523 = vrot.lane.b32.xlu0 %v491, 5
        %v524 = vpop.permute.xlu0 %523
        %525 = vrot.lane.b32.xlu0 %v493, 5
        %v526 = vpop.permute.xlu0 %525
        %v527 = vld [vmem:[%s500 + $0x2] sm:$0x1]
        %v528 = vlaneseq
        %v529 = vshrl.u32 %v528, 7
        %v530 = vsub.s32 0, %v529
        %v531 = vrot.slane %v527, %v530
        %v532 = vmul.f32 %v524, %v531
        %v533 = vmul.f32 %v526, %v531
        %v534 = vadd.f32 %v521, %v532
        %v535 = vadd.f32 %v522, %v533
        %536 = vrot.lane.b32.xlu0 %v491, 4
        %v537 = vpop.permute.xlu0 %536
        %538 = vrot.lane.b32.xlu0 %v493, 4
        %v539 = vpop.permute.xlu0 %538
        %v540 = vld [vmem:[%s500 + $0x3] sm:$0x1]
        %v541 = vlaneseq
        %v542 = vshrl.u32 %v541, 7
        %v543 = vsub.s32 0, %v542
        %v544 = vrot.slane %v540, %v543
        %v545 = vmul.f32 %v537, %v544
        %v546 = vmul.f32 %v539, %v544
        %v547 = vadd.f32 %v534, %v545
        %v548 = vadd.f32 %v535, %v546
        %549 = vrot.lane.b32.xlu0 %v491, 3
        %v550 = vpop.permute.xlu0 %549
        %551 = vrot.lane.b32.xlu0 %v493, 3
        %v552 = vpop.permute.xlu0 %551
        %v553 = vld [vmem:[%s500 + $0x4] sm:$0x1]
        %v554 = vlaneseq
        %v555 = vshrl.u32 %v554, 7
        %v556 = vsub.s32 0, %v555
        %v557 = vrot.slane %v553, %v556
        %v558 = vmul.f32 %v550, %v557
        %v559 = vmul.f32 %v552, %v557
        %v560 = vadd.f32 %v547, %v558
        %v561 = vadd.f32 %v548, %v559
        %562 = vrot.lane.b32.xlu0 %v491, 2
        %v563 = vpop.permute.xlu0 %562
        %564 = vrot.lane.b32.xlu0 %v493, 2
        %v565 = vpop.permute.xlu0 %564
        %v566 = vld [vmem:[%s500 + $0x5] sm:$0x1]
        %v567 = vlaneseq
        %v568 = vshrl.u32 %v567, 7
        %v569 = vsub.s32 0, %v568
        %v570 = vrot.slane %v566, %v569
        %v571 = vmul.f32 %v563, %v570
        %v572 = vmul.f32 %v565, %v570
        %v573 = vadd.f32 %v560, %v571
        %v574 = vadd.f32 %v561, %v572
        %575 = vrot.lane.b32.xlu0 %v491, 1
        %v576 = vpop.permute.xlu0 %575
        %577 = vrot.lane.b32.xlu0 %v493, 1
        %v578 = vpop.permute.xlu0 %577
        %v579 = vld [vmem:[%s500 + $0x6] sm:$0x1]
        %v580 = vlaneseq
        %v581 = vshrl.u32 %v580, 7
        %v582 = vsub.s32 0, %v581
        %v583 = vrot.slane %v579, %v582
        %v584 = vmul.f32 %v576, %v583
        %v585 = vmul.f32 %v578, %v583
        %v586 = vadd.f32 %v573, %v584
        %v587 = vadd.f32 %v574, %v585
        %v588 = vld [vmem:[%s500 + $0x7] sm:$0x1]
        %v589 = vlaneseq
        %v590 = vshrl.u32 %v589, 7
        %v591 = vsub.s32 0, %v590
        %v592 = vrot.slane %v588, %v591
        %v593 = vmul.f32 %v291, %v592
        %v594 = vmul.f32 %v292, %v592
        %v595 = vmul.f32 %v293, %v592
        %v599 = vrot.slane %v593, 1
        %v600 = vrot.slane %v594, 1
        %v601 = vsel %vm488, %v599, %v600
        %v602 = vrot.slane %v595, 1
        %v603 = vsel %vm488, %v600, %v602
        %v606 = vadd.f32 %v586, %v601
        %v607 = vadd.f32 %v587, %v603
        %608 = vrot.lane.b32.xlu0 %v491, 127
        %v609 = vpop.permute.xlu0 %608
        %610 = vrot.lane.b32.xlu0 %v493, 127
        %v611 = vpop.permute.xlu0 %610
        %v612 = vld [vmem:[%s500 + $0x8] sm:$0x1]
        %v613 = vlaneseq
        %v614 = vshrl.u32 %v613, 7
        %v615 = vsub.s32 0, %v614
        %v616 = vrot.slane %v612, %v615
        %v617 = vmul.f32 %v609, %v616
        %v618 = vmul.f32 %v611, %v616
        %v619 = vadd.f32 %v606, %v617
        %v620 = vadd.f32 %v607, %v618
        %621 = vrot.lane.b32.xlu0 %v491, 126
        %v622 = vpop.permute.xlu0 %621
        %623 = vrot.lane.b32.xlu0 %v493, 126
        %v624 = vpop.permute.xlu0 %623
        %v625 = vld [vmem:[%s500 + $0x9] sm:$0x1]
        %v626 = vlaneseq
        %v627 = vshrl.u32 %v626, 7
        %v628 = vsub.s32 0, %v627
        %v629 = vrot.slane %v625, %v628
        %v630 = vmul.f32 %v622, %v629
        %v631 = vmul.f32 %v624, %v629
        %v632 = vadd.f32 %v619, %v630
        %v633 = vadd.f32 %v620, %v631
        %634 = vrot.lane.b32.xlu0 %v491, 125
        %v635 = vpop.permute.xlu0 %634
        %636 = vrot.lane.b32.xlu0 %v493, 125
        %v637 = vpop.permute.xlu0 %636
        %v638 = vld [vmem:[%s500 + $0xa] sm:$0x1]
        %v639 = vlaneseq
        %v640 = vshrl.u32 %v639, 7
        %v641 = vsub.s32 0, %v640
        %v642 = vrot.slane %v638, %v641
        %v643 = vmul.f32 %v635, %v642
        %v644 = vmul.f32 %v637, %v642
        %v645 = vadd.f32 %v632, %v643
        %v646 = vadd.f32 %v633, %v644
        %647 = vrot.lane.b32.xlu0 %v491, 124
        %v648 = vpop.permute.xlu0 %647
        %649 = vrot.lane.b32.xlu0 %v493, 124
        %v650 = vpop.permute.xlu0 %649
        %v651 = vld [vmem:[%s500 + $0xb] sm:$0x1]
        %v652 = vlaneseq
        %v653 = vshrl.u32 %v652, 7
        %v654 = vsub.s32 0, %v653
        %v655 = vrot.slane %v651, %v654
        %v656 = vmul.f32 %v648, %v655
        %v657 = vmul.f32 %v650, %v655
        %v658 = vadd.f32 %v645, %v656
        %v659 = vadd.f32 %v646, %v657
        %660 = vrot.lane.b32.xlu0 %v491, 123
        %v661 = vpop.permute.xlu0 %660
        %662 = vrot.lane.b32.xlu0 %v493, 123
        %v663 = vpop.permute.xlu0 %662
        %v664 = vld [vmem:[%s500 + $0xc] sm:$0x1]
        %v665 = vlaneseq
        %v666 = vshrl.u32 %v665, 7
        %v667 = vsub.s32 0, %v666
        %v668 = vrot.slane %v664, %v667
        %v669 = vmul.f32 %v661, %v668
        %v670 = vmul.f32 %v663, %v668
        %v671 = vadd.f32 %v658, %v669
        %v672 = vadd.f32 %v659, %v670
        %673 = vrot.lane.b32.xlu0 %v491, 122
        %v674 = vpop.permute.xlu0 %673
        %675 = vrot.lane.b32.xlu0 %v493, 122
        %v676 = vpop.permute.xlu0 %675
        %v677 = vld [vmem:[%s500 + $0xd] sm:$0x1]
        %v678 = vlaneseq
        %v679 = vshrl.u32 %v678, 7
        %v680 = vsub.s32 0, %v679
        %v681 = vrot.slane %v677, %v680
        %v682 = vmul.f32 %v674, %v681
        %v683 = vmul.f32 %v676, %v681
        %v684 = vadd.f32 %v671, %v682
        %v685 = vadd.f32 %v672, %v683
        %686 = vrot.lane.b32.xlu0 %v491, 121
        %v687 = vpop.permute.xlu0 %686
        %688 = vrot.lane.b32.xlu0 %v493, 121
        %v689 = vpop.permute.xlu0 %688
        %v690 = vld [vmem:[%s500 + $0xe] sm:$0x1]
        %v691 = vlaneseq
        %v692 = vshrl.u32 %v691, 7
        %v693 = vsub.s32 0, %v692
        %v694 = vrot.slane %v690, %v693
        %v695 = vmul.f32 %v687, %v694
        %v696 = vmul.f32 %v689, %v694
        %v697 = vadd.f32 %v684, %v695
        %v698 = vadd.f32 %v685, %v696
        %vm699 = vcmask 1045504
        %v700 = vrot.slane %v291, 2
        %v701 = vrot.slane %v292, 2
        %v702 = vsel %vm699, %v700, %v701
        %v703 = vrot.slane %v293, 2
        %v704 = vsel %vm699, %v701, %v703
        %707 = vrot.lane.b32.xlu0 %v702, 7
        %v708 = vpop.permute.xlu0 %707
        %709 = vrot.lane.b32.xlu0 %v704, 7
        %v710 = vpop.permute.xlu0 %709
        %s711 = scalar_lea.vmem %s2, 32
        %v712 = vld [vmem:[%s711] sm:$0x1]
        %v713 = vlaneseq
        %v714 = vshrl.u32 %v713, 7
        %v715 = vsub.s32 0, %v714
        %v716 = vrot.slane %v712, %v715
        %v717 = vmul.f32 %v708, %v716
        %v718 = vmul.f32 %v710, %v716
        %v719 = vadd.f32 %v697, %v717
        %v720 = vadd.f32 %v698, %v718
        %721 = vrot.lane.b32.xlu0 %v702, 6
        %v722 = vpop.permute.xlu0 %721
        %723 = vrot.lane.b32.xlu0 %v704, 6
        %v724 = vpop.permute.xlu0 %723
        %v725 = vld [vmem:[%s711 + $0x1] sm:$0x1]
        %v726 = vlaneseq
        %v727 = vshrl.u32 %v726, 7
        %v728 = vsub.s32 0, %v727
        %v729 = vrot.slane %v725, %v728
        %v730 = vmul.f32 %v722, %v729
        %v731 = vmul.f32 %v724, %v729
        %v732 = vadd.f32 %v719, %v730
        %v733 = vadd.f32 %v720, %v731
        %734 = vrot.lane.b32.xlu0 %v702, 5
        %v735 = vpop.permute.xlu0 %734
        %736 = vrot.lane.b32.xlu0 %v704, 5
        %v737 = vpop.permute.xlu0 %736
        %v738 = vld [vmem:[%s711 + $0x2] sm:$0x1]
        %v739 = vlaneseq
        %v740 = vshrl.u32 %v739, 7
        %v741 = vsub.s32 0, %v740
        %v742 = vrot.slane %v738, %v741
        %v743 = vmul.f32 %v735, %v742
        %v744 = vmul.f32 %v737, %v742
        %v745 = vadd.f32 %v732, %v743
        %v746 = vadd.f32 %v733, %v744
        %747 = vrot.lane.b32.xlu0 %v702, 4
        %v748 = vpop.permute.xlu0 %747
        %749 = vrot.lane.b32.xlu0 %v704, 4
        %v750 = vpop.permute.xlu0 %749
        %v751 = vld [vmem:[%s711 + $0x3] sm:$0x1]
        %v752 = vlaneseq
        %v753 = vshrl.u32 %v752, 7
        %v754 = vsub.s32 0, %v753
        %v755 = vrot.slane %v751, %v754
        %v756 = vmul.f32 %v748, %v755
        %v757 = vmul.f32 %v750, %v755
        %v758 = vadd.f32 %v745, %v756
        %v759 = vadd.f32 %v746, %v757
        %760 = vrot.lane.b32.xlu0 %v702, 3
        %v761 = vpop.permute.xlu0 %760
        %762 = vrot.lane.b32.xlu0 %v704, 3
        %v763 = vpop.permute.xlu0 %762
        %v764 = vld [vmem:[%s711 + $0x4] sm:$0x1]
        %v765 = vlaneseq
        %v766 = vshrl.u32 %v765, 7
        %v767 = vsub.s32 0, %v766
        %v768 = vrot.slane %v764, %v767
        %v769 = vmul.f32 %v761, %v768
        %v770 = vmul.f32 %v763, %v768
        %v771 = vadd.f32 %v758, %v769
        %v772 = vadd.f32 %v759, %v770
        %773 = vrot.lane.b32.xlu0 %v702, 2
        %v774 = vpop.permute.xlu0 %773
        %775 = vrot.lane.b32.xlu0 %v704, 2
        %v776 = vpop.permute.xlu0 %775
        %v777 = vld [vmem:[%s711 + $0x5] sm:$0x1]
        %v778 = vlaneseq
        %v779 = vshrl.u32 %v778, 7
        %v780 = vsub.s32 0, %v779
        %v781 = vrot.slane %v777, %v780
        %v782 = vmul.f32 %v774, %v781
        %v783 = vmul.f32 %v776, %v781
        %v784 = vadd.f32 %v771, %v782
        %v785 = vadd.f32 %v772, %v783
        %786 = vrot.lane.b32.xlu0 %v702, 1
        %v787 = vpop.permute.xlu0 %786
        %788 = vrot.lane.b32.xlu0 %v704, 1
        %v789 = vpop.permute.xlu0 %788
        %v790 = vld [vmem:[%s711 + $0x6] sm:$0x1]
        %v791 = vlaneseq
        %v792 = vshrl.u32 %v791, 7
        %v793 = vsub.s32 0, %v792
        %v794 = vrot.slane %v790, %v793
        %v795 = vmul.f32 %v787, %v794
        %v796 = vmul.f32 %v789, %v794
        %v797 = vadd.f32 %v784, %v795
        %v798 = vadd.f32 %v785, %v796
        %v799 = vld [vmem:[%s711 + $0x7] sm:$0x1]
        %v800 = vlaneseq
        %v801 = vshrl.u32 %v800, 7
        %v802 = vsub.s32 0, %v801
        %v803 = vrot.slane %v799, %v802
        %v804 = vmul.f32 %v291, %v803
        %v805 = vmul.f32 %v292, %v803
        %v806 = vmul.f32 %v293, %v803
        %v810 = vrot.slane %v804, 2
        %v811 = vrot.slane %v805, 2
        %v812 = vsel %vm699, %v810, %v811
        %v813 = vrot.slane %v806, 2
        %v814 = vsel %vm699, %v811, %v813
        %v817 = vadd.f32 %v797, %v812
        %v818 = vadd.f32 %v798, %v814
        %819 = vrot.lane.b32.xlu0 %v702, 127
        %v820 = vpop.permute.xlu0 %819
        %821 = vrot.lane.b32.xlu0 %v704, 127
        %v822 = vpop.permute.xlu0 %821
        %v823 = vld [vmem:[%s711 + $0x8] sm:$0x1]
        %v824 = vlaneseq
        %v825 = vshrl.u32 %v824, 7
        %v826 = vsub.s32 0, %v825
        %v827 = vrot.slane %v823, %v826
        %v828 = vmul.f32 %v820, %v827
        %v829 = vmul.f32 %v822, %v827
        %v830 = vadd.f32 %v817, %v828
        %v831 = vadd.f32 %v818, %v829
        %832 = vrot.lane.b32.xlu0 %v702, 126
        %v833 = vpop.permute.xlu0 %832
        %834 = vrot.lane.b32.xlu0 %v704, 126
        %v835 = vpop.permute.xlu0 %834
        %v836 = vld [vmem:[%s711 + $0x9] sm:$0x1]
        %v837 = vlaneseq
        %v838 = vshrl.u32 %v837, 7
        %v839 = vsub.s32 0, %v838
        %v840 = vrot.slane %v836, %v839
        %v841 = vmul.f32 %v833, %v840
        %v842 = vmul.f32 %v835, %v840
        %v843 = vadd.f32 %v830, %v841
        %v844 = vadd.f32 %v831, %v842
        %845 = vrot.lane.b32.xlu0 %v702, 125
        %v846 = vpop.permute.xlu0 %845
        %847 = vrot.lane.b32.xlu0 %v704, 125
        %v848 = vpop.permute.xlu0 %847
        %v849 = vld [vmem:[%s711 + $0xa] sm:$0x1]
        %v850 = vlaneseq
        %v851 = vshrl.u32 %v850, 7
        %v852 = vsub.s32 0, %v851
        %v853 = vrot.slane %v849, %v852
        %v854 = vmul.f32 %v846, %v853
        %v855 = vmul.f32 %v848, %v853
        %v856 = vadd.f32 %v843, %v854
        %v857 = vadd.f32 %v844, %v855
        %858 = vrot.lane.b32.xlu0 %v702, 124
        %v859 = vpop.permute.xlu0 %858
        %860 = vrot.lane.b32.xlu0 %v704, 124
        %v861 = vpop.permute.xlu0 %860
        %v862 = vld [vmem:[%s711 + $0xb] sm:$0x1]
        %v863 = vlaneseq
        %v864 = vshrl.u32 %v863, 7
        %v865 = vsub.s32 0, %v864
        %v866 = vrot.slane %v862, %v865
        %v867 = vmul.f32 %v859, %v866
        %v868 = vmul.f32 %v861, %v866
        %v869 = vadd.f32 %v856, %v867
        %v870 = vadd.f32 %v857, %v868
        %871 = vrot.lane.b32.xlu0 %v702, 123
        %v872 = vpop.permute.xlu0 %871
        %873 = vrot.lane.b32.xlu0 %v704, 123
        %v874 = vpop.permute.xlu0 %873
        %v875 = vld [vmem:[%s711 + $0xc] sm:$0x1]
        %v876 = vlaneseq
        %v877 = vshrl.u32 %v876, 7
        %v878 = vsub.s32 0, %v877
        %v879 = vrot.slane %v875, %v878
        %v880 = vmul.f32 %v872, %v879
        %v881 = vmul.f32 %v874, %v879
        %v882 = vadd.f32 %v869, %v880
        %v883 = vadd.f32 %v870, %v881
        %884 = vrot.lane.b32.xlu0 %v702, 122
        %v885 = vpop.permute.xlu0 %884
        %886 = vrot.lane.b32.xlu0 %v704, 122
        %v887 = vpop.permute.xlu0 %886
        %v888 = vld [vmem:[%s711 + $0xd] sm:$0x1]
        %v889 = vlaneseq
        %v890 = vshrl.u32 %v889, 7
        %v891 = vsub.s32 0, %v890
        %v892 = vrot.slane %v888, %v891
        %v893 = vmul.f32 %v885, %v892
        %v894 = vmul.f32 %v887, %v892
        %v895 = vadd.f32 %v882, %v893
        %v896 = vadd.f32 %v883, %v894
        %897 = vrot.lane.b32.xlu0 %v702, 121
        %v898 = vpop.permute.xlu0 %897
        %899 = vrot.lane.b32.xlu0 %v704, 121
        %v900 = vpop.permute.xlu0 %899
        %v901 = vld [vmem:[%s711 + $0xe] sm:$0x1]
        %v902 = vlaneseq
        %v903 = vshrl.u32 %v902, 7
        %v904 = vsub.s32 0, %v903
        %v905 = vrot.slane %v901, %v904
        %v906 = vmul.f32 %v898, %v905
        %v907 = vmul.f32 %v900, %v905
        %v908 = vadd.f32 %v895, %v906
        %v909 = vadd.f32 %v896, %v907
        %v910 = vld [vmem:[%s3] sm:$0x1]
        %v912 = vlaneseq
        %v913 = vshrl.u32 %v912, 7
        %v914 = vsub.s32 0, %v913
        %v915 = vrot.slane %v910, %v914
        %v917 = vadd.f32 %v908, %v915
        %v918 = vadd.f32 %v909, %v915
        %v919 = vmax.f32 %v917, 0.0
        %v920 = vmax.f32 %v918, 0.0
        %v921 = vmin.f32 %v919, 6.0
        %v922 = vmin.f32 %v920, 6.0
        %vm925 = vcmask 1040384
        %v926 = vrot.slane %v921, 7
        %v927 = vrot.slane %v922, 7
        %v928 = vsel %vm925, %v926, %v927
        %v932 = vsel %vm925, 0.0, %v926
        %v933 = vsel %vm925, %v927, 0.0
        %934 = vrot.lane.b32.xlu0 %v932, 3
        %v935 = vpop.permute.xlu0 %934
        %936 = vrot.lane.b32.xlu0 %v928, 3
        %v937 = vpop.permute.xlu0 %936
        %v938 = vld [vmem:[#allocation2] sm:$0x1]
        %v939 = vlaneseq
        %v940 = vshrl.u32 %v939, 7
        %v941 = vsub.s32 0, %v940
        %v942 = vrot.slane %v938, %v941
        %v943 = vmul.f32 %v935, %v942
        %v944 = vmul.f32 %v937, %v942
        %v945 = vadd.f32 %v943, 0.0
        %v946 = vadd.f32 %v944, 0.0
        %947 = vrot.lane.b32.xlu0 %v932, 2
        %v948 = vpop.permute.xlu0 %947
        %949 = vrot.lane.b32.xlu0 %v928, 2
        %v950 = vpop.permute.xlu0 %949
        %v951 = vld [vmem:[#allocation2 + $0x1] sm:$0x1]
        %v952 = vlaneseq
        %v953 = vshrl.u32 %v952, 7
        %v954 = vsub.s32 0, %v953
        %v955 = vrot.slane %v951, %v954
        %v956 = vmul.f32 %v948, %v955
        %v957 = vmul.f32 %v950, %v955
        %v958 = vadd.f32 %v945, %v956
        %v959 = vadd.f32 %v946, %v957
        %960 = vrot.lane.b32.xlu0 %v932, 1
        %v961 = vpop.permute.xlu0 %960
        %962 = vrot.lane.b32.xlu0 %v928, 1
        %v963 = vpop.permute.xlu0 %962
        %v964 = vld [vmem:[#allocation2 + $0x2] sm:$0x1]
        %v965 = vlaneseq
        %v966 = vshrl.u32 %v965, 7
        %v967 = vsub.s32 0, %v966
        %v968 = vrot.slane %v964, %v967
        %v969 = vmul.f32 %v961, %v968
        %v970 = vmul.f32 %v963, %v968
        %v971 = vadd.f32 %v958, %v969
        %v972 = vadd.f32 %v959, %v970
        %v973 = vld [vmem:[#allocation2 + $0x3] sm:$0x1]
        %v974 = vlaneseq
        %v975 = vshrl.u32 %v974, 7
        %v976 = vsub.s32 0, %v975
        %v977 = vrot.slane %v973, %v976
        %v978 = vmul.f32 %v932, %v977
        %v979 = vmul.f32 %v928, %v977
        %v980 = vadd.f32 %v971, %v978
        %v981 = vadd.f32 %v972, %v979
        %982 = vrot.lane.b32.xlu0 %v932, 127
        %v983 = vpop.permute.xlu0 %982
        %984 = vrot.lane.b32.xlu0 %v928, 127
        %v985 = vpop.permute.xlu0 %984
        %v986 = vld [vmem:[#allocation2 + $0x4] sm:$0x1]
        %v987 = vlaneseq
        %v988 = vshrl.u32 %v987, 7
        %v989 = vsub.s32 0, %v988
        %v990 = vrot.slane %v986, %v989
        %v991 = vmul.f32 %v983, %v990
        %v992 = vmul.f32 %v985, %v990
        %v993 = vadd.f32 %v980, %v991
        %v994 = vadd.f32 %v981, %v992
        %995 = vrot.lane.b32.xlu0 %v932, 126
        %v996 = vpop.permute.xlu0 %995
        %997 = vrot.lane.b32.xlu0 %v928, 126
        %v998 = vpop.permute.xlu0 %997
        %v999 = vld [vmem:[#allocation2 + $0x5] sm:$0x1]
        %v1000 = vlaneseq
        %v1001 = vshrl.u32 %v1000, 7
        %v1002 = vsub.s32 0, %v1001
        %v1003 = vrot.slane %v999, %v1002
        %v1004 = vmul.f32 %v996, %v1003
        %v1005 = vmul.f32 %v998, %v1003
        %v1006 = vadd.f32 %v993, %v1004
        %v1007 = vadd.f32 %v994, %v1005
        %1008 = vrot.lane.b32.xlu0 %v932, 125
        %v1009 = vpop.permute.xlu0 %1008
        %1010 = vrot.lane.b32.xlu0 %v928, 125
        %v1011 = vpop.permute.xlu0 %1010
        %v1012 = vld [vmem:[#allocation2 + $0x6] sm:$0x1]
        %v1013 = vlaneseq
        %v1014 = vshrl.u32 %v1013, 7
        %v1015 = vsub.s32 0, %v1014
        %v1016 = vrot.slane %v1012, %v1015
        %v1017 = vmul.f32 %v1009, %v1016
        %v1018 = vmul.f32 %v1011, %v1016
        %v1019 = vadd.f32 %v1006, %v1017
        %v1020 = vadd.f32 %v1007, %v1018
        %1021 = vrot.lane.b32.xlu0 %v932, 124
        %v1022 = vpop.permute.xlu0 %1021
        %1023 = vrot.lane.b32.xlu0 %v928, 124
        %v1024 = vpop.permute.xlu0 %1023
        %v1025 = vld [vmem:[#allocation2 + $0x7] sm:$0x1]
        %v1026 = vlaneseq
        %v1027 = vshrl.u32 %v1026, 7
        %v1028 = vsub.s32 0, %v1027
        %v1029 = vrot.slane %v1025, %v1028
        %v1030 = vmul.f32 %v1022, %v1029
        %v1031 = vmul.f32 %v1024, %v1029
        %v1032 = vadd.f32 %v1019, %v1030
        %v1033 = vadd.f32 %v1020, %v1031
        %1034 = vrot.lane.b32.xlu0 %v932, 123
        %v1035 = vpop.permute.xlu0 %1034
        %1036 = vrot.lane.b32.xlu0 %v928, 123
        %v1037 = vpop.permute.xlu0 %1036
        %v1038 = vld [vmem:[#allocation2 + $0x8] sm:$0x1]
        %v1039 = vlaneseq
        %v1040 = vshrl.u32 %v1039, 7
        %v1041 = vsub.s32 0, %v1040
        %v1042 = vrot.slane %v1038, %v1041
        %v1043 = vmul.f32 %v1035, %v1042
        %v1044 = vmul.f32 %v1037, %v1042
        %v1045 = vadd.f32 %v1032, %v1043
        %v1046 = vadd.f32 %v1033, %v1044
        %1047 = vrot.lane.b32.xlu0 %v932, 122
        %v1048 = vpop.permute.xlu0 %1047
        %1049 = vrot.lane.b32.xlu0 %v928, 122
        %v1050 = vpop.permute.xlu0 %1049
        %v1051 = vld [vmem:[#allocation2 + $0x9] sm:$0x1]
        %v1052 = vlaneseq
        %v1053 = vshrl.u32 %v1052, 7
        %v1054 = vsub.s32 0, %v1053
        %v1055 = vrot.slane %v1051, %v1054
        %v1056 = vmul.f32 %v1048, %v1055
        %v1057 = vmul.f32 %v1050, %v1055
        %v1058 = vadd.f32 %v1045, %v1056
        %v1059 = vadd.f32 %v1046, %v1057
        %1060 = vrot.lane.b32.xlu0 %v932, 121
        %v1061 = vpop.permute.xlu0 %1060
        %1062 = vrot.lane.b32.xlu0 %v928, 121
        %v1063 = vpop.permute.xlu0 %1062
        %v1064 = vld [vmem:[#allocation2 + $0xa] sm:$0x1]
        %v1065 = vlaneseq
        %v1066 = vshrl.u32 %v1065, 7
        %v1067 = vsub.s32 0, %v1066
        %v1068 = vrot.slane %v1064, %v1067
        %v1069 = vmul.f32 %v1061, %v1068
        %v1070 = vmul.f32 %v1063, %v1068
        %v1071 = vadd.f32 %v1058, %v1069
        %v1072 = vadd.f32 %v1059, %v1070
        %1073 = vrot.lane.b32.xlu0 %v932, 120
        %v1074 = vpop.permute.xlu0 %1073
        %1075 = vrot.lane.b32.xlu0 %v928, 120
        %v1076 = vpop.permute.xlu0 %1075
        %v1077 = vld [vmem:[#allocation2 + $0xb] sm:$0x1]
        %v1078 = vlaneseq
        %v1079 = vshrl.u32 %v1078, 7
        %v1080 = vsub.s32 0, %v1079
        %v1081 = vrot.slane %v1077, %v1080
        %v1082 = vmul.f32 %v1074, %v1081
        %v1083 = vmul.f32 %v1076, %v1081
        %v1084 = vadd.f32 %v1071, %v1082
        %v1085 = vadd.f32 %v1072, %v1083
        %1086 = vrot.lane.b32.xlu0 %v932, 119
        %v1087 = vpop.permute.xlu0 %1086
        %1088 = vrot.lane.b32.xlu0 %v928, 119
        %v1089 = vpop.permute.xlu0 %1088
        %v1090 = vld [vmem:[#allocation2 + $0xc] sm:$0x1]
        %v1091 = vlaneseq
        %v1092 = vshrl.u32 %v1091, 7
        %v1093 = vsub.s32 0, %v1092
        %v1094 = vrot.slane %v1090, %v1093
        %v1095 = vmul.f32 %v1087, %v1094
        %v1096 = vmul.f32 %v1089, %v1094
        %v1097 = vadd.f32 %v1084, %v1095
        %v1098 = vadd.f32 %v1085, %v1096
        %1099 = vrot.lane.b32.xlu0 %v932, 118
        %v1100 = vpop.permute.xlu0 %1099
        %1101 = vrot.lane.b32.xlu0 %v928, 118
        %v1102 = vpop.permute.xlu0 %1101
        %v1103 = vld [vmem:[#allocation2 + $0xd] sm:$0x1]
        %v1104 = vlaneseq
        %v1105 = vshrl.u32 %v1104, 7
        %v1106 = vsub.s32 0, %v1105
        %v1107 = vrot.slane %v1103, %v1106
        %v1108 = vmul.f32 %v1100, %v1107
        %v1109 = vmul.f32 %v1102, %v1107
        %v1110 = vadd.f32 %v1097, %v1108
        %v1111 = vadd.f32 %v1098, %v1109
        %1112 = vrot.lane.b32.xlu0 %v932, 117
        %v1113 = vpop.permute.xlu0 %1112
        %1114 = vrot.lane.b32.xlu0 %v928, 117
        %v1115 = vpop.permute.xlu0 %1114
        %v1116 = vld [vmem:[#allocation2 + $0xe] sm:$0x1]
        %v1117 = vlaneseq
        %v1118 = vshrl.u32 %v1117, 7
        %v1119 = vsub.s32 0, %v1118
        %v1120 = vrot.slane %v1116, %v1119
        %v1121 = vmul.f32 %v1113, %v1120
        %v1122 = vmul.f32 %v1115, %v1120
        %v1123 = vadd.f32 %v1110, %v1121
        %v1124 = vadd.f32 %v1111, %v1122
        %v1127 = vrot.slane %v932, 1
        %v1128 = vrot.slane %v928, 1
        %v1129 = vsel %vm488, %v1127, %v1128
        %v1130 = vrot.slane %v933, 1
        %v1131 = vsel %vm488, %v1128, %v1130
        %1134 = vrot.lane.b32.xlu0 %v1129, 3
        %v1135 = vpop.permute.xlu0 %1134
        %1136 = vrot.lane.b32.xlu0 %v1131, 3
        %v1137 = vpop.permute.xlu0 %1136
        %s1138 = scalar_lea.vmem [#allocation2], 16
        %v1139 = vld [vmem:[%s1138] sm:$0x1]
        %v1140 = vlaneseq
        %v1141 = vshrl.u32 %v1140, 7
        %v1142 = vsub.s32 0, %v1141
        %v1143 = vrot.slane %v1139, %v1142
        %v1144 = vmul.f32 %v1135, %v1143
        %v1145 = vmul.f32 %v1137, %v1143
        %v1146 = vadd.f32 %v1123, %v1144
        %v1147 = vadd.f32 %v1124, %v1145
        %1148 = vrot.lane.b32.xlu0 %v1129, 2
        %v1149 = vpop.permute.xlu0 %1148
        %1150 = vrot.lane.b32.xlu0 %v1131, 2
        %v1151 = vpop.permute.xlu0 %1150
        %v1152 = vld [vmem:[%s1138 + $0x1] sm:$0x1]
        %v1153 = vlaneseq
        %v1154 = vshrl.u32 %v1153, 7
        %v1155 = vsub.s32 0, %v1154
        %v1156 = vrot.slane %v1152, %v1155
        %v1157 = vmul.f32 %v1149, %v1156
        %v1158 = vmul.f32 %v1151, %v1156
        %v1159 = vadd.f32 %v1146, %v1157
        %v1160 = vadd.f32 %v1147, %v1158
        %1161 = vrot.lane.b32.xlu0 %v1129, 1
        %v1162 = vpop.permute.xlu0 %1161
        %1163 = vrot.lane.b32.xlu0 %v1131, 1
        %v1164 = vpop.permute.xlu0 %1163
        %v1165 = vld [vmem:[%s1138 + $0x2] sm:$0x1]
        %v1166 = vlaneseq
        %v1167 = vshrl.u32 %v1166, 7
        %v1168 = vsub.s32 0, %v1167
        %v1169 = vrot.slane %v1165, %v1168
        %v1170 = vmul.f32 %v1162, %v1169
        %v1171 = vmul.f32 %v1164, %v1169
        %v1172 = vadd.f32 %v1159, %v1170
        %v1173 = vadd.f32 %v1160, %v1171
        %v1174 = vld [vmem:[%s1138 + $0x3] sm:$0x1]
        %v1175 = vlaneseq
        %v1176 = vshrl.u32 %v1175, 7
        %v1177 = vsub.s32 0, %v1176
        %v1178 = vrot.slane %v1174, %v1177
        %v1179 = vmul.f32 %v932, %v1178
        %v1180 = vmul.f32 %v928, %v1178
        %v1181 = vmul.f32 %v933, %v1178
        %v1185 = vrot.slane %v1179, 1
        %v1186 = vrot.slane %v1180, 1
        %v1187 = vsel %vm488, %v1185, %v1186
        %v1188 = vrot.slane %v1181, 1
        %v1189 = vsel %vm488, %v1186, %v1188
        %v1192 = vadd.f32 %v1172, %v1187
        %v1193 = vadd.f32 %v1173, %v1189
        %1194 = vrot.lane.b32.xlu0 %v1129, 127
        %v1195 = vpop.permute.xlu0 %1194
        %1196 = vrot.lane.b32.xlu0 %v1131, 127
        %v1197 = vpop.permute.xlu0 %1196
        %v1198 = vld [vmem:[%s1138 + $0x4] sm:$0x1]
        %v1199 = vlaneseq
        %v1200 = vshrl.u32 %v1199, 7
        %v1201 = vsub.s32 0, %v1200
        %v1202 = vrot.slane %v1198, %v1201
        %v1203 = vmul.f32 %v1195, %v1202
        %v1204 = vmul.f32 %v1197, %v1202
        %v1205 = vadd.f32 %v1192, %v1203
        %v1206 = vadd.f32 %v1193, %v1204
        %1207 = vrot.lane.b32.xlu0 %v1129, 126
        %v1208 = vpop.permute.xlu0 %1207
        %1209 = vrot.lane.b32.xlu0 %v1131, 126
        %v1210 = vpop.permute.xlu0 %1209
        %v1211 = vld [vmem:[%s1138 + $0x5] sm:$0x1]
        %v1212 = vlaneseq
        %v1213 = vshrl.u32 %v1212, 7
        %v1214 = vsub.s32 0, %v1213
        %v1215 = vrot.slane %v1211, %v1214
        %v1216 = vmul.f32 %v1208, %v1215
        %v1217 = vmul.f32 %v1210, %v1215
        %v1218 = vadd.f32 %v1205, %v1216
        %v1219 = vadd.f32 %v1206, %v1217
        %1220 = vrot.lane.b32.xlu0 %v1129, 125
        %v1221 = vpop.permute.xlu0 %1220
        %1222 = vrot.lane.b32.xlu0 %v1131, 125
        %v1223 = vpop.permute.xlu0 %1222
        %v1224 = vld [vmem:[%s1138 + $0x6] sm:$0x1]
        %v1225 = vlaneseq
        %v1226 = vshrl.u32 %v1225, 7
        %v1227 = vsub.s32 0, %v1226
        %v1228 = vrot.slane %v1224, %v1227
        %v1229 = vmul.f32 %v1221, %v1228
        %v1230 = vmul.f32 %v1223, %v1228
        %v1231 = vadd.f32 %v1218, %v1229
        %v1232 = vadd.f32 %v1219, %v1230
        %1233 = vrot.lane.b32.xlu0 %v1129, 124
        %v1234 = vpop.permute.xlu0 %1233
        %1235 = vrot.lane.b32.xlu0 %v1131, 124
        %v1236 = vpop.permute.xlu0 %1235
        %v1237 = vld [vmem:[%s1138 + $0x7] sm:$0x1]
        %v1238 = vlaneseq
        %v1239 = vshrl.u32 %v1238, 7
        %v1240 = vsub.s32 0, %v1239
        %v1241 = vrot.slane %v1237, %v1240
        %v1242 = vmul.f32 %v1234, %v1241
        %v1243 = vmul.f32 %v1236, %v1241
        %v1244 = vadd.f32 %v1231, %v1242
        %v1245 = vadd.f32 %v1232, %v1243
        %1246 = vrot.lane.b32.xlu0 %v1129, 123
        %v1247 = vpop.permute.xlu0 %1246
        %1248 = vrot.lane.b32.xlu0 %v1131, 123
        %v1249 = vpop.permute.xlu0 %1248
        %v1250 = vld [vmem:[%s1138 + $0x8] sm:$0x1]
        %v1251 = vlaneseq
        %v1252 = vshrl.u32 %v1251, 7
        %v1253 = vsub.s32 0, %v1252
        %v1254 = vrot.slane %v1250, %v1253
        %v1255 = vmul.f32 %v1247, %v1254
        %v1256 = vmul.f32 %v1249, %v1254
        %v1257 = vadd.f32 %v1244, %v1255
        %v1258 = vadd.f32 %v1245, %v1256
        %1259 = vrot.lane.b32.xlu0 %v1129, 122
        %v1260 = vpop.permute.xlu0 %1259
        %1261 = vrot.lane.b32.xlu0 %v1131, 122
        %v1262 = vpop.permute.xlu0 %1261
        %v1263 = vld [vmem:[%s1138 + $0x9] sm:$0x1]
        %v1264 = vlaneseq
        %v1265 = vshrl.u32 %v1264, 7
        %v1266 = vsub.s32 0, %v1265
        %v1267 = vrot.slane %v1263, %v1266
        %v1268 = vmul.f32 %v1260, %v1267
        %v1269 = vmul.f32 %v1262, %v1267
        %v1270 = vadd.f32 %v1257, %v1268
        %v1271 = vadd.f32 %v1258, %v1269
        %1272 = vrot.lane.b32.xlu0 %v1129, 121
        %v1273 = vpop.permute.xlu0 %1272
        %1274 = vrot.lane.b32.xlu0 %v1131, 121
        %v1275 = vpop.permute.xlu0 %1274
        %v1276 = vld [vmem:[%s1138 + $0xa] sm:$0x1]
        %v1277 = vlaneseq
        %v1278 = vshrl.u32 %v1277, 7
        %v1279 = vsub.s32 0, %v1278
        %v1280 = vrot.slane %v1276, %v1279
        %v1281 = vmul.f32 %v1273, %v1280
        %v1282 = vmul.f32 %v1275, %v1280
        %v1283 = vadd.f32 %v1270, %v1281
        %v1284 = vadd.f32 %v1271, %v1282
        %1285 = vrot.lane.b32.xlu0 %v1129, 120
        %v1286 = vpop.permute.xlu0 %1285
        %1287 = vrot.lane.b32.xlu0 %v1131, 120
        %v1288 = vpop.permute.xlu0 %1287
        %v1289 = vld [vmem:[%s1138 + $0xb] sm:$0x1]
        %v1290 = vlaneseq
        %v1291 = vshrl.u32 %v1290, 7
        %v1292 = vsub.s32 0, %v1291
        %v1293 = vrot.slane %v1289, %v1292
        %v1294 = vmul.f32 %v1286, %v1293
        %v1295 = vmul.f32 %v1288, %v1293
        %v1296 = vadd.f32 %v1283, %v1294
        %v1297 = vadd.f32 %v1284, %v1295
        %1298 = vrot.lane.b32.xlu0 %v1129, 119
        %v1299 = vpop.permute.xlu0 %1298
        %1300 = vrot.lane.b32.xlu0 %v1131, 119
        %v1301 = vpop.permute.xlu0 %1300
        %v1302 = vld [vmem:[%s1138 + $0xc] sm:$0x1]
        %v1303 = vlaneseq
        %v1304 = vshrl.u32 %v1303, 7
        %v1305 = vsub.s32 0, %v1304
        %v1306 = vrot.slane %v1302, %v1305
        %v1307 = vmul.f32 %v1299, %v1306
        %v1308 = vmul.f32 %v1301, %v1306
        %v1309 = vadd.f32 %v1296, %v1307
        %v1310 = vadd.f32 %v1297, %v1308
        %1311 = vrot.lane.b32.xlu0 %v1129, 118
        %v1312 = vpop.permute.xlu0 %1311
        %1313 = vrot.lane.b32.xlu0 %v1131, 118
        %v1314 = vpop.permute.xlu0 %1313
        %v1315 = vld [vmem:[%s1138 + $0xd] sm:$0x1]
        %v1316 = vlaneseq
        %v1317 = vshrl.u32 %v1316, 7
        %v1318 = vsub.s32 0, %v1317
        %v1319 = vrot.slane %v1315, %v1318
        %v1320 = vmul.f32 %v1312, %v1319
        %v1321 = vmul.f32 %v1314, %v1319
        %v1322 = vadd.f32 %v1309, %v1320
        %v1323 = vadd.f32 %v1310, %v1321
        %1324 = vrot.lane.b32.xlu0 %v1129, 117
        %v1325 = vpop.permute.xlu0 %1324
        %1326 = vrot.lane.b32.xlu0 %v1131, 117
        %v1327 = vpop.permute.xlu0 %1326
        %v1328 = vld [vmem:[%s1138 + $0xe] sm:$0x1]
        %v1329 = vlaneseq
        %v1330 = vshrl.u32 %v1329, 7
        %v1331 = vsub.s32 0, %v1330
        %v1332 = vrot.slane %v1328, %v1331
        %v1333 = vmul.f32 %v1325, %v1332
        %v1334 = vmul.f32 %v1327, %v1332
        %v1335 = vadd.f32 %v1322, %v1333
        %v1336 = vadd.f32 %v1323, %v1334
        %v1337 = vrot.slane %v932, 2
        %v1338 = vrot.slane %v928, 2
        %v1339 = vsel %vm699, %v1337, %v1338
        %v1340 = vrot.slane %v933, 2
        %v1341 = vsel %vm699, %v1338, %v1340
        %1344 = vrot.lane.b32.xlu0 %v1339, 3
        %v1345 = vpop.permute.xlu0 %1344
        %1346 = vrot.lane.b32.xlu0 %v1341, 3
        %v1347 = vpop.permute.xlu0 %1346
        %s1348 = scalar_lea.vmem [#allocation2], 32
        %v1349 = vld [vmem:[%s1348] sm:$0x1]
        %v1350 = vlaneseq
        %v1351 = vshrl.u32 %v1350, 7
        %v1352 = vsub.s32 0, %v1351
        %v1353 = vrot.slane %v1349, %v1352
        %v1354 = vmul.f32 %v1345, %v1353
        %v1355 = vmul.f32 %v1347, %v1353
        %v1356 = vadd.f32 %v1335, %v1354
        %v1357 = vadd.f32 %v1336, %v1355
        %1358 = vrot.lane.b32.xlu0 %v1339, 2
        %v1359 = vpop.permute.xlu0 %1358
        %1360 = vrot.lane.b32.xlu0 %v1341, 2
        %v1361 = vpop.permute.xlu0 %1360
        %v1362 = vld [vmem:[%s1348 + $0x1] sm:$0x1]
        %v1363 = vlaneseq
        %v1364 = vshrl.u32 %v1363, 7
        %v1365 = vsub.s32 0, %v1364
        %v1366 = vrot.slane %v1362, %v1365
        %v1367 = vmul.f32 %v1359, %v1366
        %v1368 = vmul.f32 %v1361, %v1366
        %v1369 = vadd.f32 %v1356, %v1367
        %v1370 = vadd.f32 %v1357, %v1368
        %1371 = vrot.lane.b32.xlu0 %v1339, 1
        %v1372 = vpop.permute.xlu0 %1371
        %1373 = vrot.lane.b32.xlu0 %v1341, 1
        %v1374 = vpop.permute.xlu0 %1373
        %v1375 = vld [vmem:[%s1348 + $0x2] sm:$0x1]
        %v1376 = vlaneseq
        %v1377 = vshrl.u32 %v1376, 7
        %v1378 = vsub.s32 0, %v1377
        %v1379 = vrot.slane %v1375, %v1378
        %v1380 = vmul.f32 %v1372, %v1379
        %v1381 = vmul.f32 %v1374, %v1379
        %v1382 = vadd.f32 %v1369, %v1380
        %v1383 = vadd.f32 %v1370, %v1381
        %v1384 = vld [vmem:[%s1348 + $0x3] sm:$0x1]
        %v1385 = vlaneseq
        %v1386 = vshrl.u32 %v1385, 7
        %v1387 = vsub.s32 0, %v1386
        %v1388 = vrot.slane %v1384, %v1387
        %v1389 = vmul.f32 %v932, %v1388
        %v1390 = vmul.f32 %v928, %v1388
        %v1391 = vmul.f32 %v933, %v1388
        %v1395 = vrot.slane %v1389, 2
        %v1396 = vrot.slane %v1390, 2
        %v1397 = vsel %vm699, %v1395, %v1396
        %v1398 = vrot.slane %v1391, 2
        %v1399 = vsel %vm699, %v1396, %v1398
        %v1402 = vadd.f32 %v1382, %v1397
        %v1403 = vadd.f32 %v1383, %v1399
        %1404 = vrot.lane.b32.xlu0 %v1339, 127
        %v1405 = vpop.permute.xlu0 %1404
        %1406 = vrot.lane.b32.xlu0 %v1341, 127
        %v1407 = vpop.permute.xlu0 %1406
        %v1408 = vld [vmem:[%s1348 + $0x4] sm:$0x1]
        %v1409 = vlaneseq
        %v1410 = vshrl.u32 %v1409, 7
        %v1411 = vsub.s32 0, %v1410
        %v1412 = vrot.slane %v1408, %v1411
        %v1413 = vmul.f32 %v1405, %v1412
        %v1414 = vmul.f32 %v1407, %v1412
        %v1415 = vadd.f32 %v1402, %v1413
        %v1416 = vadd.f32 %v1403, %v1414
        %1417 = vrot.lane.b32.xlu0 %v1339, 126
        %v1418 = vpop.permute.xlu0 %1417
        %1419 = vrot.lane.b32.xlu0 %v1341, 126
        %v1420 = vpop.permute.xlu0 %1419
        %v1421 = vld [vmem:[%s1348 + $0x5] sm:$0x1]
        %v1422 = vlaneseq
        %v1423 = vshrl.u32 %v1422, 7
        %v1424 = vsub.s32 0, %v1423
        %v1425 = vrot.slane %v1421, %v1424
        %v1426 = vmul.f32 %v1418, %v1425
        %v1427 = vmul.f32 %v1420, %v1425
        %v1428 = vadd.f32 %v1415, %v1426
        %v1429 = vadd.f32 %v1416, %v1427
        %1430 = vrot.lane.b32.xlu0 %v1339, 125
        %v1431 = vpop.permute.xlu0 %1430
        %1432 = vrot.lane.b32.xlu0 %v1341, 125
        %v1433 = vpop.permute.xlu0 %1432
        %v1434 = vld [vmem:[%s1348 + $0x6] sm:$0x1]
        %v1435 = vlaneseq
        %v1436 = vshrl.u32 %v1435, 7
        %v1437 = vsub.s32 0, %v1436
        %v1438 = vrot.slane %v1434, %v1437
        %v1439 = vmul.f32 %v1431, %v1438
        %v1440 = vmul.f32 %v1433, %v1438
        %v1441 = vadd.f32 %v1428, %v1439
        %v1442 = vadd.f32 %v1429, %v1440
        %1443 = vrot.lane.b32.xlu0 %v1339, 124
        %v1444 = vpop.permute.xlu0 %1443
        %1445 = vrot.lane.b32.xlu0 %v1341, 124
        %v1446 = vpop.permute.xlu0 %1445
        %v1447 = vld [vmem:[%s1348 + $0x7] sm:$0x1]
        %v1448 = vlaneseq
        %v1449 = vshrl.u32 %v1448, 7
        %v1450 = vsub.s32 0, %v1449
        %v1451 = vrot.slane %v1447, %v1450
        %v1452 = vmul.f32 %v1444, %v1451
        %v1453 = vmul.f32 %v1446, %v1451
        %v1454 = vadd.f32 %v1441, %v1452
        %v1455 = vadd.f32 %v1442, %v1453
        %1456 = vrot.lane.b32.xlu0 %v1339, 123
        %v1457 = vpop.permute.xlu0 %1456
        %1458 = vrot.lane.b32.xlu0 %v1341, 123
        %v1459 = vpop.permute.xlu0 %1458
        %v1460 = vld [vmem:[%s1348 + $0x8] sm:$0x1]
        %v1461 = vlaneseq
        %v1462 = vshrl.u32 %v1461, 7
        %v1463 = vsub.s32 0, %v1462
        %v1464 = vrot.slane %v1460, %v1463
        %v1465 = vmul.f32 %v1457, %v1464
        %v1466 = vmul.f32 %v1459, %v1464
        %v1467 = vadd.f32 %v1454, %v1465
        %v1468 = vadd.f32 %v1455, %v1466
        %1469 = vrot.lane.b32.xlu0 %v1339, 122
        %v1470 = vpop.permute.xlu0 %1469
        %1471 = vrot.lane.b32.xlu0 %v1341, 122
        %v1472 = vpop.permute.xlu0 %1471
        %v1473 = vld [vmem:[%s1348 + $0x9] sm:$0x1]
        %v1474 = vlaneseq
        %v1475 = vshrl.u32 %v1474, 7
        %v1476 = vsub.s32 0, %v1475
        %v1477 = vrot.slane %v1473, %v1476
        %v1478 = vmul.f32 %v1470, %v1477
        %v1479 = vmul.f32 %v1472, %v1477
        %v1480 = vadd.f32 %v1467, %v1478
        %v1481 = vadd.f32 %v1468, %v1479
        %1482 = vrot.lane.b32.xlu0 %v1339, 121
        %v1483 = vpop.permute.xlu0 %1482
        %1484 = vrot.lane.b32.xlu0 %v1341, 121
        %v1485 = vpop.permute.xlu0 %1484
        %v1486 = vld [vmem:[%s1348 + $0xa] sm:$0x1]
        %v1487 = vlaneseq
        %v1488 = vshrl.u32 %v1487, 7
        %v1489 = vsub.s32 0, %v1488
        %v1490 = vrot.slane %v1486, %v1489
        %v1491 = vmul.f32 %v1483, %v1490
        %v1492 = vmul.f32 %v1485, %v1490
        %v1493 = vadd.f32 %v1480, %v1491
        %v1494 = vadd.f32 %v1481, %v1492
        %1495 = vrot.lane.b32.xlu0 %v1339, 120
        %v1496 = vpop.permute.xlu0 %1495
        %1497 = vrot.lane.b32.xlu0 %v1341, 120
        %v1498 = vpop.permute.xlu0 %1497
        %v1499 = vld [vmem:[%s1348 + $0xb] sm:$0x1]
        %v1500 = vlaneseq
        %v1501 = vshrl.u32 %v1500, 7
        %v1502 = vsub.s32 0, %v1501
        %v1503 = vrot.slane %v1499, %v1502
        %v1504 = vmul.f32 %v1496, %v1503
        %v1505 = vmul.f32 %v1498, %v1503
        %v1506 = vadd.f32 %v1493, %v1504
        %v1507 = vadd.f32 %v1494, %v1505
        %1508 = vrot.lane.b32.xlu0 %v1339, 119
        %v1509 = vpop.permute.xlu0 %1508
        %1510 = vrot.lane.b32.xlu0 %v1341, 119
        %v1511 = vpop.permute.xlu0 %1510
        %v1512 = vld [vmem:[%s1348 + $0xc] sm:$0x1]
        %v1513 = vlaneseq
        %v1514 = vshrl.u32 %v1513, 7
        %v1515 = vsub.s32 0, %v1514
        %v1516 = vrot.slane %v1512, %v1515
        %v1517 = vmul.f32 %v1509, %v1516
        %v1518 = vmul.f32 %v1511, %v1516
        %v1519 = vadd.f32 %v1506, %v1517
        %v1520 = vadd.f32 %v1507, %v1518
        %1521 = vrot.lane.b32.xlu0 %v1339, 118
        %v1522 = vpop.permute.xlu0 %1521
        %1523 = vrot.lane.b32.xlu0 %v1341, 118
        %v1524 = vpop.permute.xlu0 %1523
        %v1525 = vld [vmem:[%s1348 + $0xd] sm:$0x1]
        %v1526 = vlaneseq
        %v1527 = vshrl.u32 %v1526, 7
        %v1528 = vsub.s32 0, %v1527
        %v1529 = vrot.slane %v1525, %v1528
        %v1530 = vmul.f32 %v1522, %v1529
        %v1531 = vmul.f32 %v1524, %v1529
        %v1532 = vadd.f32 %v1519, %v1530
        %v1533 = vadd.f32 %v1520, %v1531
        %1534 = vrot.lane.b32.xlu0 %v1339, 117
        %v1535 = vpop.permute.xlu0 %1534
        %1536 = vrot.lane.b32.xlu0 %v1341, 117
        %v1537 = vpop.permute.xlu0 %1536
        %v1538 = vld [vmem:[%s1348 + $0xe] sm:$0x1]
        %v1539 = vlaneseq
        %v1540 = vshrl.u32 %v1539, 7
        %v1541 = vsub.s32 0, %v1540
        %v1542 = vrot.slane %v1538, %v1541
        %v1543 = vmul.f32 %v1535, %v1542
        %v1544 = vmul.f32 %v1537, %v1542
        %v1545 = vadd.f32 %v1532, %v1543
        %v1546 = vadd.f32 %v1533, %v1544
        %v1547 = vld [vmem:[%s5] sm:$0x1]
        %v1549 = vlaneseq
        %v1550 = vshrl.u32 %v1549, 7
        %v1551 = vsub.s32 0, %v1550
        %v1552 = vrot.slane %v1547, %v1551
        %v1554 = vadd.f32 %v1545, %v1552
        %v1555 = vadd.f32 %v1546, %v1552
        %v1556 = vld [vmem:[%s284] sm:$0xff]
        %v1557 = vld [vmem:[%s284 + $0x8] sm:$0xff]
        %v1558 = vadd.f32 %v1554, %v1556
        %v1559 = vadd.f32 %v1555, %v1557
        %1560 = vst [vmem:[%s274] sm:$0xff] %v1558
        %1561 = vst [vmem:[%s274 + $0x8] sm:$0xff] %v1559
        %s1562 = sand.u32 %s165, 1
        %s1563 = scalar_lea.sflag [#allocation4], %s1562
        %s1564 = sand.u32 %s165, 1
        %s1565 = smul.addr %s1564, 16
        %s1566 = scalar_lea.vmem [#allocation5], %s1565
        // Predicated region
        $region49: #{tpu_custom_call.1} parent=43 // pred_check
          %p1567 = pneg %p175
        $region50: #{tpu_custom_call.1} parent=43 // pred_check_branch
          %1569 = sbr.rel (%p1567) target = $region52
        $region51: #{tpu_custom_call.1} parent=43 // pred_region
          %s1571 = ssub.s32 256, 256
          %1572 = vsyncadd %s1563, %s1571
          %s1573 = smul.addr %s21, 2
          %s1574 = smul.addr %s1573, 128
          %s1575 = scalar_lea.hbm %s6, %s1574
          %s1576 = sshll.u32 %s1566, 4
          %s1577 = int_to_ptr.vmem [resolvable:$true] %s1576
          %1582 = dma.vmem_to_hbm [thread:$0]  %s1577, 256, %s1575, %s1563, 128, 128, 8
        $region52: #{tpu_custom_call.1} parent=43 // pred_fallthru
          _
      $region44: #{tpu_custom_call.1} parent=5 // pred_fallthru
        _
      %p1583 = scmp.le.s32.totalorder 2, %s16
      // Predicated region
      $region53: #{tpu_custom_call.1} parent=5 // pred_check
        %p1584 = pneg %p1583
      $region54: #{tpu_custom_call.1} parent=5 // pred_check_branch
        %1586 = sbr.rel (%p1584) target = $region56
      $region55: #{tpu_custom_call.1} parent=5 // pred_region
        %s1587 = ssub.s32 %s16, 2
        // Predicated region
        $region57: #{tpu_custom_call.1} parent=55 // pred_check
          %p1588 = pneg %p181
        $region58: #{tpu_custom_call.1} parent=55 // pred_check_branch
          %1590 = sbr.rel (%p1588) target = $region60
        $region59: #{tpu_custom_call.1} parent=55 // pred_region
          %s1591 = sand.u32 %s166, 1
          %s1592 = scalar_lea.sflag [#allocation4], %s1591
          %s1593 = sand.u32 %s166, 1
          %s1594 = smul.addr %s1593, 16
          %s1595 = scalar_lea.vmem [#allocation5], %s1594
          %1596 = dma.done %s1592, 256
        $region60: #{tpu_custom_call.1} parent=55 // pred_fallthru
          _
      $region56: #{tpu_custom_call.1} parent=5 // pred_fallthru
        _
    $region6: #{tpu_custom_call.1} parent=1 // loop_footer
      %s20 = sadd.s32 1, %s16
    $region7: #{tpu_custom_call.1} parent=1 // loop_footer_branch
      %15 = sbr.rel target = $region3
    $region8: #{tpu_custom_call.1} parent=1 // loop_exit
      _
    %1597 = vsyncpa [#allocation3], 1
    %s1598 = scalar_lea.sflag [#allocation3], 1
    %1599 = vsyncpa %s1598, 1
    %1600 = vsyncpa [#allocation4], 1
    %s1601 = scalar_lea.sflag [#allocation4], 1
    %1602 = vsyncpa %s1601, 1

</llo_original>
